<compile_context>
chip_gen: v6e
topology: v6e:2x2x1
jax: 0.10.0
libtpu: 0.0.40
codegen_flags: <defaults>
</compile_context>

<pallas_src>
import functools

import jax
import jax.numpy as jnp
from jax.experimental import pallas as pl
from jax.experimental.pallas import tpu as pltpu

LOG_SIG_MAX = 2.0
LOG_SIG_MIN = -20.0
MU = 0.01           # MoELayer mu
ATTN_EPS = 1e-6     # eps added to attention weights before log


def _policy_kernel(E, A,
                   x_ref, oh_ref,
                   w1_ref, b1_ref, w2_ref, b2_ref, w3_ref, b3_ref, tq_ref,
                   w1p_ref, b1p_ref, w2bd_ref, b2p_ref, kvbd_ref,
                   fold_ref, tileh_ref, sel_ref, expe_ref,
                   wh_ref, bh_ref,
                   out_ref):
    f32 = jnp.float32
    H = w2_ref.shape[0]
    EH = E * H

    def mm(a, w_ref):
        return jnp.dot(a, w_ref[...], preferred_element_type=f32)

    # ---- backbone MLP -> (TB, H) ----
    h = jnp.maximum(mm(x_ref[...], w1_ref) + b1_ref[...], 0.0)
    h = jnp.maximum(mm(h, w2_ref) + b2_ref[...], 0.0)
    h = jnp.maximum(mm(h, w3_ref) + b3_ref[...], 0.0)

    # task query lookup via one-hot matmul (== task_queries[task])  (TB, H)
    q = mm(oh_ref[...], tq_ref)

    # ---- all E experts at once, lane-packed (TB, E*H) ----
    h1 = jnp.maximum(mm(h, w1p_ref) + b1p_ref[...], 0.0)      # concat expert layer 1
    h2 = jnp.maximum(mm(h1, w2bd_ref) + b2p_ref[...], 0.0)    # block-diag layer 2
    kv = mm(h2, kvbd_ref)                                     # fused keys|values (TB, 2*E*H)
    k = kv[:, :EH]                                            # vreg-aligned lane split
    v = kv[:, EH:]

    # attention scores: per-expert <k_e, q> via block-sum selector  (TB, E)
    q_t = mm(q, tileh_ref)                                    # q tiled E times on lanes
    scores = mm(k * q_t, sel_ref)

    # cosine-similarity bookkeeping (per-row contribution only; batch mean is
    # finished in the wrapper so batch tiling stays correct)
    sumsq = mm(v * v, sel_ref)                                # (TB, E)  ||v_e||^2
    rsq = jax.lax.rsqrt(jnp.maximum(sumsq, 1e-24))            # == 1/max(||v_e||,1e-12)
    n = v * mm(rsq, expe_ref)                                 # packed normalized values
    norm_sum = mm(n, fold_ref)                                # (TB, H)  sum_e n_e
    rownorm = jnp.sum(norm_sum * norm_sum, axis=-1, keepdims=True)   # (TB, 1)

    # softmax over experts on a lane-dense (TB, E) tile
    m = jnp.max(scores, axis=-1, keepdims=True)
    ex = jnp.exp(scores - m)
    denom = jnp.sum(ex, axis=-1, keepdims=True)               # in [1, E]
    w = ex * pl.reciprocal(denom, approx=True)                # (TB, E)
    log_sum = jnp.sum(jnp.log(w + ATTN_EPS), axis=-1, keepdims=True)
    reg_local = (-(1.0 / E) * MU) * log_sum                   # (TB, 1)

    # tower input: sum_e w_e * v_e  ->  (TB, H)
    tower = mm(mm(w, expe_ref) * v, fold_ref)

    # ---- fused lane-dense head: [mean | log_std | reg_local | rownorm | 0...] ----
    out = mm(tower, wh_ref) + bh_ref[...]                     # (TB, P), P % 128 == 0
    lane = jax.lax.broadcasted_iota(jnp.int32, out.shape, 1)
    is_logstd = jnp.logical_and(lane >= A, lane < 2 * A)
    out = jnp.where(is_logstd, jnp.clip(out, LOG_SIG_MIN, LOG_SIG_MAX), out)
    out = out + jnp.where(lane == 2 * A, reg_local, 0.0)
    out = out + jnp.where(lane == 2 * A + 1, rownorm, 0.0)
    out_ref[...] = out


def make_params(key, obs_size, action_size, hidden_dim, num_tasks, num_experts):
    # total experts = num_experts + len(task_specific_experts) (== +1)
    E = num_experts + 1
    din = obs_size - num_tasks
    H = hidden_dim
    ks = jax.random.split(key, 17)

    def uni(k, shape, fan_in):
        b = 1.0 / float(fan_in) ** 0.5
        return jax.random.uniform(k, shape, jnp.float32, -b, b)

    params = dict(
        w1=uni(ks[0], (din, H), din), b1=uni(ks[1], (1, H), din),
        w2=uni(ks[2], (H, H), H),     b2=uni(ks[3], (1, H), H),
        w3=uni(ks[4], (H, H), H),     b3=uni(ks[5], (1, H), H),
        we1=uni(ks[6], (E, H, H), H), be1=uni(ks[7], (E, 1, H), H),
        we2=uni(ks[8], (E, H, H), H), be2=uni(ks[9], (E, 1, H), H),
        tq=uni(ks[10], (num_tasks, H), H),
        km=uni(ks[11], (E, H, H), H),
        vm=uni(ks[12], (E, H, H), H),
        wm=uni(ks[13], (H, action_size), H), bm=uni(ks[14], (1, action_size), H),
        wl=uni(ks[15], (H, action_size), H), bl=uni(ks[16], (1, action_size), H),
    )
    return params, E


def _pack_params(params, E, P):
    """Build lane-dense packed weights + static fold/selector matrices (host side)."""
    f32 = jnp.float32
    H = params["w2"].shape[0]
    A = params["wm"].shape[1]
    EH = E * H

    w1p = jnp.concatenate([params["we1"][e] for e in range(E)], axis=1)       # (H, EH)
    b1p = jnp.concatenate([params["be1"][e] for e in range(E)], axis=1)       # (1, EH)
    b2p = jnp.concatenate([params["be2"][e] for e in range(E)], axis=1)       # (1, EH)

    def block_diag(w):                                                        # (E,H,H)->(EH,EH)
        out = jnp.zeros((EH, EH), f32)
        for e in range(E):
            out = out.at[e * H:(e + 1) * H, e * H:(e + 1) * H].set(w[e])
        return out

    w2bd = block_diag(params["we2"])
    kvbd = jnp.concatenate([block_diag(params["km"]),
                            block_diag(params["vm"])], axis=1)                # (EH, 2EH)

    fold = jnp.tile(jnp.eye(H, dtype=f32), (E, 1))                            # (EH, H)
    tile_h = fold.T                                                           # (H, EH)
    sel = jnp.kron(jnp.eye(E, dtype=f32), jnp.ones((H, 1), f32))              # (EH, E)
    expand_e = sel.T                                                          # (E, EH)

    wh = (jnp.zeros((H, P), f32)
          .at[:, :A].set(params["wm"]).at[:, A:2 * A].set(params["wl"]))
    bh = (jnp.zeros((1, P), f32)
          .at[:, :A].set(params["bm"]).at[:, A:2 * A].set(params["bl"]))
    return w1p, b1p, w2bd, b2p, kvbd, fold, tile_h, sel, expand_e, wh, bh


def gaussian_policy_forward(obs, params, num_tasks, E):
    B, obs_size = obs.shape
    assert E >= 2, "similarity term divides by E*(E-1); need at least 2 experts"
    state = obs[:, : obs_size - num_tasks]
    onehot = obs[:, obs_size - num_tasks:]
    Din = state.shape[1]
    A = params["wm"].shape[1]
    P = ((2 * A + 2 + 127) // 128) * 128          # lane-dense packed output width

    (w1p, b1p, w2bd, b2p, kvbd,
     fold, tile_h, sel, expand_e, wh, bh) = _pack_params(params, E, P)

    # Batch tiling: small batches run in one grid step (per-step overhead dominates);
    # bigger batches are row-tiled on a "parallel" axis (both v7x TensorCores).
    if B <= 64:
        TB = B
    elif B % 128 == 0:
        TB = 128
    elif B % 8 == 0:
        TB = 8
    else:
        TB = B
    nb = pl.cdiv(B, TB)

    args = [state, onehot,
            params["w1"], params["b1"], params["w2"], params["b2"],
            params["w3"], params["b3"], params["tq"],
            w1p, b1p, w2bd, b2p, kvbd,
            fold, tile_h, sel, expand_e, wh, bh]

    def row_spec(cols):
        return pl.BlockSpec((TB, cols), lambda g: (g, 0))

    def full_spec(a):
        # Whole-array VMEM residency: fine at these sizes (< 1 MiB total).
        # TODO(synk): tile expert weights over a grid axis + set vmem_limit_bytes
        # before scaling hidden_dim / num_experts (footprint ~ 4*(3+4E)*H^2 bytes).
        return pl.BlockSpec(a.shape, lambda g: (0,) * a.ndim)

    in_specs = [row_spec(Din), row_spec(num_tasks)] + [full_spec(a) for a in args[2:]]

    slab = pl.pallas_call(
        functools.partial(_policy_kernel, E, A),
        out_shape=jax.ShapeDtypeStruct((B, P), jnp.float32),
        grid=(nb,),
        in_specs=in_specs,
        out_specs=pl.BlockSpec((TB, P), lambda g: (g, 0)),
        compiler_params=pltpu.CompilerParams(dimension_semantics=("parallel",)),
    )(*args)

    mean = slab[:, :A]
    log_std = slab[:, A:2 * A]
    reg_local = slab[:, 2 * A]
    rownorm = slab[:, 2 * A + 1]
    # batch-mean of the strict upper triangle of the normalized gram:
    #   sum_all = sum_b ||sum_e n_e(b)||^2 ; trace = B*E (rows are unit norm)
    similarity = (jnp.sum(rownorm) - B * E) / (B * E * (E - 1))
    reg = reg_local + MU * similarity
    return mean, log_std, reg


def reference_forward(obs, params, num_tasks, E, mu=MU):
    """Plain-JAX mirror of the PyTorch forward (used for verification)."""
    state = obs[:, :-num_tasks]
    onehot = obs[:, -num_tasks:]
    task = jnp.argmax(onehot, axis=-1)
    relu = jax.nn.relu
    x = relu(state @ params["w1"] + params["b1"])
    x = relu(x @ params["w2"] + params["b2"])
    x = relu(x @ params["w3"] + params["b3"])
    eo = jnp.stack(
        [relu(relu(x @ params["we1"][e] + params["be1"][e]) @ params["we2"][e]
              + params["be2"][e]) for e in range(E)], axis=1)      # (B, E, H)
    keys = jnp.einsum("kli,lij->klj", eo, params["km"])
    vals = jnp.einsum("kli,lij->klj", eo, params["vm"])
    nrm = vals / jnp.maximum(jnp.linalg.norm(vals, axis=-1, keepdims=True), 1e-12)
    sim = jnp.einsum("bih,bjh->bij", nrm, nrm)
    mask = jnp.triu(jnp.ones((E, E), dtype=bool), 1)
    similarity = jnp.sum(sim * mask[None]) / (obs.shape[0] * mask.sum())
    q = params["tq"][task]
    scores = jnp.einsum("kni,ki->kn", keys, q)
    w = jax.nn.softmax(scores, axis=-1)
    tower = jnp.einsum("kn,kni->ki", w, vals)
    reg = -(1.0 / E) * mu * jnp.sum(jnp.log(w + ATTN_EPS), axis=-1) + mu * similarity
    mean = tower @ params["wm"] + params["bm"]
    log_std = jnp.clip(tower @ params["wl"] + params["bl"], LOG_SIG_MIN, LOG_SIG_MAX)
    return mean, log_std, reg


if __name__ == "__main__":
    B = 16
    obs_size, action_size, hidden_dim = 22, 4, 32
    num_tasks, num_experts = 10, 3

    key = jax.random.PRNGKey(0)
    kp, ko, kt = jax.random.split(key, 3)
    params, E = make_params(kp, obs_size, action_size, hidden_dim,
                            num_tasks, num_experts)

    state = jax.random.normal(ko, (B, obs_size - num_tasks), jnp.float32)
    task_ids = jax.random.randint(kt, (B,), 0, num_tasks)
    onehot = jax.nn.one_hot(task_ids, num_tasks, dtype=jnp.float32)
    obs = jnp.concatenate([state, onehot], axis=-1)      # (B, obs_size)

    mean, log_std, reg = gaussian_policy_forward(obs, params, num_tasks, E)
    jax.block_until_ready((mean, log_std, reg))

    rm, rl, rr = reference_forward(obs, params, num_tasks, E)
    # Slightly relaxed tolerance accounts for the EUP approx-reciprocal fast path
    # in the softmax (exact packing/semantics otherwise).
    assert jnp.allclose(mean, rm, atol=5e-3, rtol=5e-3), float(jnp.max(jnp.abs(mean - rm)))
    assert jnp.allclose(log_std, rl, atol=5e-3, rtol=5e-3), float(jnp.max(jnp.abs(log_std - rl)))
    assert jnp.allclose(reg, rr, atol=1e-3, rtol=1e-2), float(jnp.max(jnp.abs(reg - rr)))

    # TODO(synk): `sample()` (rsample + tanh-squash log-prob) not implemented; only forward().
    print("KERNEL_OK")
</pallas_src>

<mosaic_0001>
module attributes {stable_mosaic.version = 11 : i64} {
  func.func @_policy_kernel(%arg0: i32, %arg1: memref<16x12xf32, #tpu.memory_space<vmem>>, %arg2: memref<16x10xf32, #tpu.memory_space<vmem>>, %arg3: memref<12x32xf32, #tpu.memory_space<vmem>>, %arg4: memref<1x32xf32, #tpu.memory_space<vmem>>, %arg5: memref<32x32xf32, #tpu.memory_space<vmem>>, %arg6: memref<1x32xf32, #tpu.memory_space<vmem>>, %arg7: memref<32x32xf32, #tpu.memory_space<vmem>>, %arg8: memref<1x32xf32, #tpu.memory_space<vmem>>, %arg9: memref<10x32xf32, #tpu.memory_space<vmem>>, %arg10: memref<32x128xf32, #tpu.memory_space<vmem>>, %arg11: memref<1x128xf32, #tpu.memory_space<vmem>>, %arg12: memref<128x128xf32, #tpu.memory_space<vmem>>, %arg13: memref<1x128xf32, #tpu.memory_space<vmem>>, %arg14: memref<128x256xf32, #tpu.memory_space<vmem>>, %arg15: memref<128x32xf32, #tpu.memory_space<vmem>>, %arg16: memref<32x128xf32, #tpu.memory_space<vmem>>, %arg17: memref<128x4xf32, #tpu.memory_space<vmem>>, %arg18: memref<4x128xf32, #tpu.memory_space<vmem>>, %arg19: memref<32x128xf32, #tpu.memory_space<vmem>>, %arg20: memref<1x128xf32, #tpu.memory_space<vmem>>, %arg21: memref<16x128xf32, #tpu.memory_space<vmem>>) attributes {dimension_semantics = [#tpu.dimension_semantics<parallel>], iteration_bounds = array<i64: 1>, scalar_prefetch = 0 : i64, scratch_operands = 0 : i64, tpu.core_type = #tpu.core_type<tc>, window_params = [{transform_indices = @transform_0, window_bounds = array<i64: 16, 12>}, {transform_indices = @transform_1, window_bounds = array<i64: 16, 10>}, {pipeline_mode = #tpu.pipeline_mode<synchronous>, transform_indices = @transform_2, window_bounds = array<i64: 12, 32>}, {pipeline_mode = #tpu.pipeline_mode<synchronous>, transform_indices = @transform_3, window_bounds = array<i64: 1, 32>}, {pipeline_mode = #tpu.pipeline_mode<synchronous>, transform_indices = @transform_4, window_bounds = array<i64: 32, 32>}, {pipeline_mode = #tpu.pipeline_mode<synchronous>, transform_indices = @transform_5, window_bounds = array<i64: 1, 32>}, {pipeline_mode = #tpu.pipeline_mode<synchronous>, transform_indices = @transform_6, window_bounds = array<i64: 32, 32>}, {pipeline_mode = #tpu.pipeline_mode<synchronous>, transform_indices = @transform_7, window_bounds = array<i64: 1, 32>}, {pipeline_mode = #tpu.pipeline_mode<synchronous>, transform_indices = @transform_8, window_bounds = array<i64: 10, 32>}, {pipeline_mode = #tpu.pipeline_mode<synchronous>, transform_indices = @transform_9, window_bounds = array<i64: 32, 128>}, {pipeline_mode = #tpu.pipeline_mode<synchronous>, transform_indices = @transform_10, window_bounds = array<i64: 1, 128>}, {pipeline_mode = #tpu.pipeline_mode<synchronous>, transform_indices = @transform_11, window_bounds = array<i64: 128, 128>}, {pipeline_mode = #tpu.pipeline_mode<synchronous>, transform_indices = @transform_12, window_bounds = array<i64: 1, 128>}, {pipeline_mode = #tpu.pipeline_mode<synchronous>, transform_indices = @transform_13, window_bounds = array<i64: 128, 256>}, {pipeline_mode = #tpu.pipeline_mode<synchronous>, transform_indices = @transform_14, window_bounds = array<i64: 128, 32>}, {pipeline_mode = #tpu.pipeline_mode<synchronous>, transform_indices = @transform_15, window_bounds = array<i64: 32, 128>}, {pipeline_mode = #tpu.pipeline_mode<synchronous>, transform_indices = @transform_16, window_bounds = array<i64: 128, 4>}, {pipeline_mode = #tpu.pipeline_mode<synchronous>, transform_indices = @transform_17, window_bounds = array<i64: 4, 128>}, {pipeline_mode = #tpu.pipeline_mode<synchronous>, transform_indices = @transform_18, window_bounds = array<i64: 32, 128>}, {pipeline_mode = #tpu.pipeline_mode<synchronous>, transform_indices = @transform_19, window_bounds = array<i64: 1, 128>}, {transform_indices = @transform_20, window_bounds = array<i64: 16, 128>}]} {
    %c0 = arith.constant 0 : index
    %c0_0 = arith.constant 0 : index
    %0 = vector.load %arg1[%c0, %c0_0] : memref<16x12xf32, #tpu.memory_space<vmem>>, vector<16x12xf32>
    %c0_1 = arith.constant 0 : index
    %c0_2 = arith.constant 0 : index
    %1 = vector.load %arg3[%c0_1, %c0_2] : memref<12x32xf32, #tpu.memory_space<vmem>>, vector<12x32xf32>
    %cst = arith.constant dense<0.000000e+00> : vector<16x32xf32>
    %2 = tpu.matmul %0, %1, %cst {dimension_numbers = #tpu.dot_dimension_numbers<[1], [0], [0], [1], [0, 0, 1, 1], [], []>} : vector<16x12xf32>, vector<12x32xf32>, vector<16x32xf32> -> vector<16x32xf32>
    %c0_3 = arith.constant 0 : index
    %c0_4 = arith.constant 0 : index
    %3 = vector.load %arg4[%c0_3, %c0_4] : memref<1x32xf32, #tpu.memory_space<vmem>>, vector<1x32xf32>
    %4 = vector.broadcast %3 : vector<1x32xf32> to vector<16x32xf32>
    %5 = arith.addf %2, %4 : vector<16x32xf32>
    %cst_5 = arith.constant 0.000000e+00 : f32
    %6 = vector.broadcast %cst_5 : f32 to vector<16x32xf32>
    %7 = arith.maximumf %5, %6 : vector<16x32xf32>
    %c0_6 = arith.constant 0 : index
    %c0_7 = arith.constant 0 : index
    %8 = vector.load %arg5[%c0_6, %c0_7] : memref<32x32xf32, #tpu.memory_space<vmem>>, vector<32x32xf32>
    %cst_8 = arith.constant dense<0.000000e+00> : vector<16x32xf32>
    %9 = tpu.matmul %7, %8, %cst_8 {dimension_numbers = #tpu.dot_dimension_numbers<[1], [0], [0], [1], [0, 0, 1, 1], [], []>} : vector<16x32xf32>, vector<32x32xf32>, vector<16x32xf32> -> vector<16x32xf32>
    %c0_9 = arith.constant 0 : index
    %c0_10 = arith.constant 0 : index
    %10 = vector.load %arg6[%c0_9, %c0_10] : memref<1x32xf32, #tpu.memory_space<vmem>>, vector<1x32xf32>
    %11 = vector.broadcast %10 : vector<1x32xf32> to vector<16x32xf32>
    %12 = arith.addf %9, %11 : vector<16x32xf32>
    %cst_11 = arith.constant 0.000000e+00 : f32
    %13 = vector.broadcast %cst_11 : f32 to vector<16x32xf32>
    %14 = arith.maximumf %12, %13 : vector<16x32xf32>
    %c0_12 = arith.constant 0 : index
    %c0_13 = arith.constant 0 : index
    %15 = vector.load %arg7[%c0_12, %c0_13] : memref<32x32xf32, #tpu.memory_space<vmem>>, vector<32x32xf32>
    %cst_14 = arith.constant dense<0.000000e+00> : vector<16x32xf32>
    %16 = tpu.matmul %14, %15, %cst_14 {dimension_numbers = #tpu.dot_dimension_numbers<[1], [0], [0], [1], [0, 0, 1, 1], [], []>} : vector<16x32xf32>, vector<32x32xf32>, vector<16x32xf32> -> vector<16x32xf32>
    %c0_15 = arith.constant 0 : index
    %c0_16 = arith.constant 0 : index
    %17 = vector.load %arg8[%c0_15, %c0_16] : memref<1x32xf32, #tpu.memory_space<vmem>>, vector<1x32xf32>
    %18 = vector.broadcast %17 : vector<1x32xf32> to vector<16x32xf32>
    %19 = arith.addf %16, %18 : vector<16x32xf32>
    %cst_17 = arith.constant 0.000000e+00 : f32
    %20 = vector.broadcast %cst_17 : f32 to vector<16x32xf32>
    %21 = arith.maximumf %19, %20 : vector<16x32xf32>
    %c0_18 = arith.constant 0 : index
    %c0_19 = arith.constant 0 : index
    %22 = vector.load %arg2[%c0_18, %c0_19] : memref<16x10xf32, #tpu.memory_space<vmem>>, vector<16x10xf32>
    %c0_20 = arith.constant 0 : index
    %c0_21 = arith.constant 0 : index
    %23 = vector.load %arg9[%c0_20, %c0_21] : memref<10x32xf32, #tpu.memory_space<vmem>>, vector<10x32xf32>
    %cst_22 = arith.constant dense<0.000000e+00> : vector<16x32xf32>
    %24 = tpu.matmul %22, %23, %cst_22 {dimension_numbers = #tpu.dot_dimension_numbers<[1], [0], [0], [1], [0, 0, 1, 1], [], []>} : vector<16x10xf32>, vector<10x32xf32>, vector<16x32xf32> -> vector<16x32xf32>
    %c0_23 = arith.constant 0 : index
    %c0_24 = arith.constant 0 : index
    %25 = vector.load %arg10[%c0_23, %c0_24] : memref<32x128xf32, #tpu.memory_space<vmem>>, vector<32x128xf32>
    %cst_25 = arith.constant dense<0.000000e+00> : vector<16x128xf32>
    %26 = tpu.matmul %21, %25, %cst_25 {dimension_numbers = #tpu.dot_dimension_numbers<[1], [0], [0], [1], [0, 0, 1, 1], [], []>} : vector<16x32xf32>, vector<32x128xf32>, vector<16x128xf32> -> vector<16x128xf32>
    %c0_26 = arith.constant 0 : index
    %c0_27 = arith.constant 0 : index
    %27 = vector.load %arg11[%c0_26, %c0_27] : memref<1x128xf32, #tpu.memory_space<vmem>>, vector<1x128xf32>
    %28 = vector.broadcast %27 : vector<1x128xf32> to vector<16x128xf32>
    %29 = arith.addf %26, %28 : vector<16x128xf32>
    %cst_28 = arith.constant 0.000000e+00 : f32
    %30 = vector.broadcast %cst_28 : f32 to vector<16x128xf32>
    %31 = arith.maximumf %29, %30 : vector<16x128xf32>
    %c0_29 = arith.constant 0 : index
    %c0_30 = arith.constant 0 : index
    %32 = vector.load %arg12[%c0_29, %c0_30] : memref<128x128xf32, #tpu.memory_space<vmem>>, vector<128x128xf32>
    %cst_31 = arith.constant dense<0.000000e+00> : vector<16x128xf32>
    %33 = tpu.matmul %31, %32, %cst_31 {dimension_numbers = #tpu.dot_dimension_numbers<[1], [0], [0], [1], [0, 0, 1, 1], [], []>} : vector<16x128xf32>, vector<128x128xf32>, vector<16x128xf32> -> vector<16x128xf32>
    %c0_32 = arith.constant 0 : index
    %c0_33 = arith.constant 0 : index
    %34 = vector.load %arg13[%c0_32, %c0_33] : memref<1x128xf32, #tpu.memory_space<vmem>>, vector<1x128xf32>
    %35 = vector.broadcast %34 : vector<1x128xf32> to vector<16x128xf32>
    %36 = arith.addf %33, %35 : vector<16x128xf32>
    %cst_34 = arith.constant 0.000000e+00 : f32
    %37 = vector.broadcast %cst_34 : f32 to vector<16x128xf32>
    %38 = arith.maximumf %36, %37 : vector<16x128xf32>
    %c0_35 = arith.constant 0 : index
    %c0_36 = arith.constant 0 : index
    %39 = vector.load %arg14[%c0_35, %c0_36] : memref<128x256xf32, #tpu.memory_space<vmem>>, vector<128x256xf32>
    %cst_37 = arith.constant dense<0.000000e+00> : vector<16x256xf32>
    %40 = tpu.matmul %38, %39, %cst_37 {dimension_numbers = #tpu.dot_dimension_numbers<[1], [0], [0], [1], [0, 0, 1, 1], [], []>} : vector<16x128xf32>, vector<128x256xf32>, vector<16x256xf32> -> vector<16x256xf32>
    %41 = vector.extract_strided_slice %40 {offsets = [0, 0], sizes = [16, 128], strides = [1, 1]} : vector<16x256xf32> to vector<16x128xf32>
    %42 = vector.extract_strided_slice %40 {offsets = [0, 128], sizes = [16, 128], strides = [1, 1]} : vector<16x256xf32> to vector<16x128xf32>
    %c0_38 = arith.constant 0 : index
    %c0_39 = arith.constant 0 : index
    %43 = vector.load %arg16[%c0_38, %c0_39] : memref<32x128xf32, #tpu.memory_space<vmem>>, vector<32x128xf32>
    %cst_40 = arith.constant dense<0.000000e+00> : vector<16x128xf32>
    %44 = tpu.matmul %24, %43, %cst_40 {dimension_numbers = #tpu.dot_dimension_numbers<[1], [0], [0], [1], [0, 0, 1, 1], [], []>} : vector<16x32xf32>, vector<32x128xf32>, vector<16x128xf32> -> vector<16x128xf32>
    %45 = arith.mulf %41, %44 : vector<16x128xf32>
    %c0_41 = arith.constant 0 : index
    %c0_42 = arith.constant 0 : index
    %46 = vector.load %arg17[%c0_41, %c0_42] : memref<128x4xf32, #tpu.memory_space<vmem>>, vector<128x4xf32>
    %cst_43 = arith.constant dense<0.000000e+00> : vector<16x4xf32>
    %47 = tpu.matmul %45, %46, %cst_43 {dimension_numbers = #tpu.dot_dimension_numbers<[1], [0], [0], [1], [0, 0, 1, 1], [], []>} : vector<16x128xf32>, vector<128x4xf32>, vector<16x4xf32> -> vector<16x4xf32>
    %48 = arith.mulf %42, %42 : vector<16x128xf32>
    %c0_44 = arith.constant 0 : index
    %c0_45 = arith.constant 0 : index
    %49 = vector.load %arg17[%c0_44, %c0_45] : memref<128x4xf32, #tpu.memory_space<vmem>>, vector<128x4xf32>
    %cst_46 = arith.constant dense<0.000000e+00> : vector<16x4xf32>
    %50 = tpu.matmul %48, %49, %cst_46 {dimension_numbers = #tpu.dot_dimension_numbers<[1], [0], [0], [1], [0, 0, 1, 1], [], []>} : vector<16x128xf32>, vector<128x4xf32>, vector<16x4xf32> -> vector<16x4xf32>
    %cst_47 = arith.constant 1.000000e-24 : f32
    %51 = vector.broadcast %cst_47 : f32 to vector<16x4xf32>
    %52 = arith.maximumf %50, %51 : vector<16x4xf32>
    %53 = math.rsqrt %52 : vector<16x4xf32>
    %c0_48 = arith.constant 0 : index
    %c0_49 = arith.constant 0 : index
    %54 = vector.load %arg18[%c0_48, %c0_49] : memref<4x128xf32, #tpu.memory_space<vmem>>, vector<4x128xf32>
    %cst_50 = arith.constant dense<0.000000e+00> : vector<16x128xf32>
    %55 = tpu.matmul %53, %54, %cst_50 {dimension_numbers = #tpu.dot_dimension_numbers<[1], [0], [0], [1], [0, 0, 1, 1], [], []>} : vector<16x4xf32>, vector<4x128xf32>, vector<16x128xf32> -> vector<16x128xf32>
    %56 = arith.mulf %42, %55 : vector<16x128xf32>
    %c0_51 = arith.constant 0 : index
    %c0_52 = arith.constant 0 : index
    %57 = vector.load %arg15[%c0_51, %c0_52] : memref<128x32xf32, #tpu.memory_space<vmem>>, vector<128x32xf32>
    %cst_53 = arith.constant dense<0.000000e+00> : vector<16x32xf32>
    %58 = tpu.matmul %56, %57, %cst_53 {dimension_numbers = #tpu.dot_dimension_numbers<[1], [0], [0], [1], [0, 0, 1, 1], [], []>} : vector<16x128xf32>, vector<128x32xf32>, vector<16x32xf32> -> vector<16x32xf32>
    %59 = arith.mulf %58, %58 : vector<16x32xf32>
    %cst_54 = arith.constant dense<0.000000e+00> : vector<16xf32>
    %60 = vector.multi_reduction <add>, %59, %cst_54 [1] : vector<16x32xf32> to vector<16xf32>
    %61 = vector.shape_cast %60 : vector<16xf32> to vector<16x1xf32>
    %cst_55 = arith.constant dense<0xFF800000> : vector<16xf32>
    %62 = vector.multi_reduction <maximumf>, %47, %cst_55 [1] : vector<16x4xf32> to vector<16xf32>
    %63 = vector.shape_cast %62 : vector<16xf32> to vector<16x1xf32>
    %64 = vector.broadcast %63 : vector<16x1xf32> to vector<16x4xf32>
    %65 = arith.subf %47, %64 : vector<16x4xf32>
    %66 = math.exp %65 : vector<16x4xf32>
    %cst_56 = arith.constant dense<0.000000e+00> : vector<16xf32>
    %67 = vector.multi_reduction <add>, %66, %cst_56 [1] : vector<16x4xf32> to vector<16xf32>
    %68 = vector.shape_cast %67 : vector<16xf32> to vector<16x1xf32>
    %69 = tpu.reciprocal %68 {approx = true} : vector<16x1xf32> -> vector<16x1xf32>
    %70 = vector.broadcast %69 : vector<16x1xf32> to vector<16x4xf32>
    %71 = arith.mulf %66, %70 : vector<16x4xf32>
    %cst_57 = arith.constant 9.99999997E-7 : f32
    %72 = vector.broadcast %cst_57 : f32 to vector<16x4xf32>
    %73 = arith.addf %71, %72 : vector<16x4xf32>
    %74 = math.log %73 : vector<16x4xf32>
    %cst_58 = arith.constant dense<0.000000e+00> : vector<16xf32>
    %75 = vector.multi_reduction <add>, %74, %cst_58 [1] : vector<16x4xf32> to vector<16xf32>
    %76 = vector.shape_cast %75 : vector<16xf32> to vector<16x1xf32>
    %cst_59 = arith.constant -2.500000e-03 : f32
    %77 = vector.broadcast %cst_59 : f32 to vector<16x1xf32>
    %78 = arith.mulf %77, %76 : vector<16x1xf32>
    %c0_60 = arith.constant 0 : index
    %c0_61 = arith.constant 0 : index
    %79 = vector.load %arg18[%c0_60, %c0_61] : memref<4x128xf32, #tpu.memory_space<vmem>>, vector<4x128xf32>
    %cst_62 = arith.constant dense<0.000000e+00> : vector<16x128xf32>
    %80 = tpu.matmul %71, %79, %cst_62 {dimension_numbers = #tpu.dot_dimension_numbers<[1], [0], [0], [1], [0, 0, 1, 1], [], []>} : vector<16x4xf32>, vector<4x128xf32>, vector<16x128xf32> -> vector<16x128xf32>
    %81 = arith.mulf %80, %42 : vector<16x128xf32>
    %c0_63 = arith.constant 0 : index
    %c0_64 = arith.constant 0 : index
    %82 = vector.load %arg15[%c0_63, %c0_64] : memref<128x32xf32, #tpu.memory_space<vmem>>, vector<128x32xf32>
    %cst_65 = arith.constant dense<0.000000e+00> : vector<16x32xf32>
    %83 = tpu.matmul %81, %82, %cst_65 {dimension_numbers = #tpu.dot_dimension_numbers<[1], [0], [0], [1], [0, 0, 1, 1], [], []>} : vector<16x128xf32>, vector<128x32xf32>, vector<16x32xf32> -> vector<16x32xf32>
    %c0_66 = arith.constant 0 : index
    %c0_67 = arith.constant 0 : index
    %84 = vector.load %arg19[%c0_66, %c0_67] : memref<32x128xf32, #tpu.memory_space<vmem>>, vector<32x128xf32>
    %cst_68 = arith.constant dense<0.000000e+00> : vector<16x128xf32>
    %85 = tpu.matmul %83, %84, %cst_68 {dimension_numbers = #tpu.dot_dimension_numbers<[1], [0], [0], [1], [0, 0, 1, 1], [], []>} : vector<16x32xf32>, vector<32x128xf32>, vector<16x128xf32> -> vector<16x128xf32>
    %c0_69 = arith.constant 0 : index
    %c0_70 = arith.constant 0 : index
    %86 = vector.load %arg20[%c0_69, %c0_70] : memref<1x128xf32, #tpu.memory_space<vmem>>, vector<1x128xf32>
    %87 = vector.broadcast %86 : vector<1x128xf32> to vector<16x128xf32>
    %88 = arith.addf %85, %87 : vector<16x128xf32>
    %89 = tpu.iota {dimensions = array<i32: 1>} : vector<16x128xi32>
    %c4_i32 = arith.constant 4 : i32
    %90 = vector.broadcast %c4_i32 : i32 to vector<16x128xi32>
    %91 = arith.cmpi sge, %89, %90 : vector<16x128xi32>
    %c8_i32 = arith.constant 8 : i32
    %92 = vector.broadcast %c8_i32 : i32 to vector<16x128xi32>
    %93 = arith.cmpi slt, %89, %92 : vector<16x128xi32>
    %94 = arith.andi %91, %93 : vector<16x128xi1>
    %cst_71 = arith.constant -2.000000e+01 : f32
    %cst_72 = arith.constant 2.000000e+00 : f32
    %95 = vector.broadcast %cst_71 : f32 to vector<16x128xf32>
    %96 = arith.maximumf %95, %88 : vector<16x128xf32>
    %97 = vector.broadcast %cst_72 : f32 to vector<16x128xf32>
    %98 = arith.minimumf %97, %96 : vector<16x128xf32>
    %99 = arith.select %94, %98, %88 : vector<16x128xi1>, vector<16x128xf32>
    %c8_i32_73 = arith.constant 8 : i32
    %100 = vector.broadcast %c8_i32_73 : i32 to vector<16x128xi32>
    %101 = arith.cmpi eq, %89, %100 : vector<16x128xi32>
    %cst_74 = arith.constant 0.000000e+00 : f32
    %102 = vector.shape_cast %78 : vector<16x1xf32> to vector<16x1xf32>
    %103 = vector.broadcast %102 : vector<16x1xf32> to vector<16x128xf32>
    %104 = vector.broadcast %cst_74 : f32 to vector<16x128xf32>
    %105 = arith.select %101, %103, %104 : vector<16x128xi1>, vector<16x128xf32>
    %106 = arith.addf %99, %105 : vector<16x128xf32>
    %c9_i32 = arith.constant 9 : i32
    %107 = vector.broadcast %c9_i32 : i32 to vector<16x128xi32>
    %108 = arith.cmpi eq, %89, %107 : vector<16x128xi32>
    %cst_75 = arith.constant 0.000000e+00 : f32
    %109 = vector.shape_cast %61 : vector<16x1xf32> to vector<16x1xf32>
    %110 = vector.broadcast %109 : vector<16x1xf32> to vector<16x128xf32>
    %111 = vector.broadcast %cst_75 : f32 to vector<16x128xf32>
    %112 = arith.select %108, %110, %111 : vector<16x128xi1>, vector<16x128xf32>
    %113 = arith.addf %106, %112 : vector<16x128xf32>
    %c0_76 = arith.constant 0 : index
    %c0_77 = arith.constant 0 : index
    %114 = vector.load %arg21[%c0_76, %c0_77] : memref<16x128xf32, #tpu.memory_space<vmem>>, vector<16x128xf32>
    tpu.vector_store %arg21[%c0_76, %c0_77], %113 {strides = array<i32>} : memref<16x128xf32, #tpu.memory_space<vmem>>, vector<16x128xf32>,
    return
  }
  func.func @transform_0(%arg0: i32) -> (i32, i32) {
    %c0_i32 = arith.constant 0 : i32
    %c0_i32_0 = arith.constant 0 : i32
    return %arg0, %c0_i32 : i32, i32
  }
  func.func @transform_1(%arg0: i32) -> (i32, i32) {
    %c0_i32 = arith.constant 0 : i32
    %c0_i32_0 = arith.constant 0 : i32
    return %arg0, %c0_i32 : i32, i32
  }
  func.func @transform_2(%arg0: i32) -> (i32, i32) {
    %c0_i32 = arith.constant 0 : i32
    %c0_i32_0 = arith.constant 0 : i32
    %c0_i32_1 = arith.constant 0 : i32
    return %c0_i32, %c0_i32_0 : i32, i32
  }
  func.func @transform_3(%arg0: i32) -> (i32, i32) {
    %c0_i32 = arith.constant 0 : i32
    %c0_i32_0 = arith.constant 0 : i32
    %c0_i32_1 = arith.constant 0 : i32
    return %c0_i32, %c0_i32_0 : i32, i32
  }
  func.func @transform_4(%arg0: i32) -> (i32, i32) {
    %c0_i32 = arith.constant 0 : i32
    %c0_i32_0 = arith.constant 0 : i32
    %c0_i32_1 = arith.constant 0 : i32
    return %c0_i32, %c0_i32_0 : i32, i32
  }
  func.func @transform_5(%arg0: i32) -> (i32, i32) {
    %c0_i32 = arith.constant 0 : i32
    %c0_i32_0 = arith.constant 0 : i32
    %c0_i32_1 = arith.constant 0 : i32
    return %c0_i32, %c0_i32_0 : i32, i32
  }
  func.func @transform_6(%arg0: i32) -> (i32, i32) {
    %c0_i32 = arith.constant 0 : i32
    %c0_i32_0 = arith.constant 0 : i32
    %c0_i32_1 = arith.constant 0 : i32
    return %c0_i32, %c0_i32_0 : i32, i32
  }
  func.func @transform_7(%arg0: i32) -> (i32, i32) {
    %c0_i32 = arith.constant 0 : i32
    %c0_i32_0 = arith.constant 0 : i32
    %c0_i32_1 = arith.constant 0 : i32
    return %c0_i32, %c0_i32_0 : i32, i32
  }
  func.func @transform_8(%arg0: i32) -> (i32, i32) {
    %c0_i32 = arith.constant 0 : i32
    %c0_i32_0 = arith.constant 0 : i32
    %c0_i32_1 = arith.constant 0 : i32
    return %c0_i32, %c0_i32_0 : i32, i32
  }
  func.func @transform_9(%arg0: i32) -> (i32, i32) {
    %c0_i32 = arith.constant 0 : i32
    %c0_i32_0 = arith.constant 0 : i32
    %c0_i32_1 = arith.constant 0 : i32
    return %c0_i32, %c0_i32_0 : i32, i32
  }
  func.func @transform_10(%arg0: i32) -> (i32, i32) {
    %c0_i32 = arith.constant 0 : i32
    %c0_i32_0 = arith.constant 0 : i32
    %c0_i32_1 = arith.constant 0 : i32
    return %c0_i32, %c0_i32_0 : i32, i32
  }
  func.func @transform_11(%arg0: i32) -> (i32, i32) {
    %c0_i32 = arith.constant 0 : i32
    %c0_i32_0 = arith.constant 0 : i32
    %c0_i32_1 = arith.constant 0 : i32
    return %c0_i32, %c0_i32_0 : i32, i32
  }
  func.func @transform_12(%arg0: i32) -> (i32, i32) {
    %c0_i32 = arith.constant 0 : i32
    %c0_i32_0 = arith.constant 0 : i32
    %c0_i32_1 = arith.constant 0 : i32
    return %c0_i32, %c0_i32_0 : i32, i32
  }
  func.func @transform_13(%arg0: i32) -> (i32, i32) {
    %c0_i32 = arith.constant 0 : i32
    %c0_i32_0 = arith.constant 0 : i32
    %c0_i32_1 = arith.constant 0 : i32
    return %c0_i32, %c0_i32_0 : i32, i32
  }
  func.func @transform_14(%arg0: i32) -> (i32, i32) {
    %c0_i32 = arith.constant 0 : i32
    %c0_i32_0 = arith.constant 0 : i32
    %c0_i32_1 = arith.constant 0 : i32
    return %c0_i32, %c0_i32_0 : i32, i32
  }
  func.func @transform_15(%arg0: i32) -> (i32, i32) {
    %c0_i32 = arith.constant 0 : i32
    %c0_i32_0 = arith.constant 0 : i32
    %c0_i32_1 = arith.constant 0 : i32
    return %c0_i32, %c0_i32_0 : i32, i32
  }
  func.func @transform_16(%arg0: i32) -> (i32, i32) {
    %c0_i32 = arith.constant 0 : i32
    %c0_i32_0 = arith.constant 0 : i32
    %c0_i32_1 = arith.constant 0 : i32
    return %c0_i32, %c0_i32_0 : i32, i32
  }
  func.func @transform_17(%arg0: i32) -> (i32, i32) {
    %c0_i32 = arith.constant 0 : i32
    %c0_i32_0 = arith.constant 0 : i32
    %c0_i32_1 = arith.constant 0 : i32
    return %c0_i32, %c0_i32_0 : i32, i32
  }
  func.func @transform_18(%arg0: i32) -> (i32, i32) {
    %c0_i32 = arith.constant 0 : i32
    %c0_i32_0 = arith.constant 0 : i32
    %c0_i32_1 = arith.constant 0 : i32
    return %c0_i32, %c0_i32_0 : i32, i32
  }
  func.func @transform_19(%arg0: i32) -> (i32, i32) {
    %c0_i32 = arith.constant 0 : i32
    %c0_i32_0 = arith.constant 0 : i32
    %c0_i32_1 = arith.constant 0 : i32
    return %c0_i32, %c0_i32_0 : i32, i32
  }
  func.func @transform_20(%arg0: i32) -> (i32, i32) {
    %c0_i32 = arith.constant 0 : i32
    %c0_i32_0 = arith.constant 0 : i32
    return %arg0, %c0_i32 : i32, i32
  }
}

</mosaic_0001>

<llo_original>
// kernel: tpu_custom_call.1
$region0: #{tpu_custom_call.1}
  #allocation0 [shape = 'u32[]', space=smem, size = 0x4, offset = 0x4, fixed_abs, tag = 'smem constant byte address 0x4 - core index']
  #allocation1 [shape = 'u32[144,128]{1,0:T(1,128)}', space=vmem, size = 0x12000, scoped, tag = 'internal scratch']
  %s0 = inlined_call_operand.hbm [shape: f32[16,12], index: 0, kind: input, shape index: {}]
  %s1 = inlined_call_operand.hbm [shape: f32[16,10], index: 1, kind: input, shape index: {}]
  %s2 = inlined_call_operand.hbm [shape: f32[12,32], index: 2, kind: input, shape index: {}]
  %s3 = inlined_call_operand.vmem [shape: f32[1,32], index: 3, kind: input, shape index: {}]
  %s4 = inlined_call_operand.vmem [shape: f32[32,32], index: 4, kind: input, shape index: {}]
  %s5 = inlined_call_operand.hbm [shape: f32[1,32], index: 5, kind: input, shape index: {}]
  %s6 = inlined_call_operand.hbm [shape: f32[32,32], index: 6, kind: input, shape index: {}]
  %s7 = inlined_call_operand.hbm [shape: f32[1,32], index: 7, kind: input, shape index: {}]
  %s8 = inlined_call_operand.hbm [shape: f32[10,32], index: 8, kind: input, shape index: {}]
  %s9 = inlined_call_operand.hbm [shape: f32[32,128], index: 9, kind: input, shape index: {}]
  %s10 = inlined_call_operand.hbm [shape: f32[1,128], index: 10, kind: input, shape index: {}]
  %s11 = inlined_call_operand.hbm [shape: f32[128,128], index: 11, kind: input, shape index: {}]
  %s12 = inlined_call_operand.hbm [shape: f32[1,128], index: 12, kind: input, shape index: {}]
  %s13 = inlined_call_operand.vmem [shape: f32[128,256], index: 13, kind: input, shape index: {}]
  %s14 = inlined_call_operand.vmem [shape: f32[128,32], index: 14, kind: input, shape index: {}]
  %s15 = inlined_call_operand.hbm [shape: f32[32,128], index: 15, kind: input, shape index: {}]
  %s16 = inlined_call_operand.vmem [shape: f32[128,4], index: 16, kind: input, shape index: {}]
  %s17 = inlined_call_operand.hbm [shape: f32[4,128], index: 17, kind: input, shape index: {}]
  %s18 = inlined_call_operand.vmem [shape: f32[32,128], index: 18, kind: input, shape index: {}]
  %s19 = inlined_call_operand.vmem [shape: f32[1,128], index: 19, kind: input, shape index: {}]
  %s20 = inlined_call_operand.hbm [shape: f32[16,128], index: 20, kind: output, shape index: {}]
  %s21 = sld [smem:[#allocation0]]
  $region142: #{tpu_custom_call.1} parent=0
    _
  %s23 = ssub.s32 1, %s21
  %s24 = scalar_select 0, %s23, %s21
  $region1: #{tpu_custom_call.1} parent=0
    #allocation2 [shape = 'u8[8192]{0}', space=vmem, size = 0x2000, scoped, tag = 'input window, operand 0, single buffered']
    #allocation3 [shape = 's32[1]{0}', space=sflag, size = 0x4, scoped, tag = 'scoped memory for tpu_custom_call.1']
    #allocation4 [shape = 's32[1]{0}', space=sflag, size = 0x4, scoped, tag = 'scoped memory for tpu_custom_call.1']
    #allocation5 [shape = 'u8[8192]{0}', space=vmem, size = 0x2000, scoped, tag = 'input window, operand 1, single buffered']
    #allocation6 [shape = 's32[1]{0}', space=sflag, size = 0x4, scoped, tag = 'scoped memory for tpu_custom_call.1']
    #allocation7 [shape = 'u8[8192]{0}', space=vmem, size = 0x2000, scoped, tag = 'input window, operand 2, single buffered']
    #allocation8 [shape = 'u8[512]{0}', space=vmem, size = 0x400, scoped, tag = 'input window, operand 5, single buffered']
    #allocation9 [shape = 's32[1]{0}', space=sflag, size = 0x4, scoped, tag = 'scoped memory for tpu_custom_call.1']
    #allocation10 [shape = 'u8[16384]{0}', space=vmem, size = 0x4000, scoped, tag = 'input window, operand 6, single buffered']
    #allocation11 [shape = 'u8[512]{0}', space=vmem, size = 0x400, scoped, tag = 'input window, operand 7, single buffered']
    #allocation12 [shape = 's32[1]{0}', space=sflag, size = 0x4, scoped, tag = 'scoped memory for tpu_custom_call.1']
    #allocation13 [shape = 'u8[8192]{0}', space=vmem, size = 0x2000, scoped, tag = 'input window, operand 8, single buffered']
    #allocation14 [shape = 'u8[16384]{0}', space=vmem, size = 0x4000, scoped, tag = 'input window, operand 9, single buffered']
    #allocation15 [shape = 's32[1]{0}', space=sflag, size = 0x4, scoped, tag = 'scoped memory for tpu_custom_call.1']
    #allocation16 [shape = 'u8[512]{0}', space=vmem, size = 0x400, scoped, tag = 'input window, operand 10, single buffered']
    #allocation17 [shape = 'u8[65536]{0}', space=vmem, size = 0x10000, scoped, tag = 'input window, operand 11, single buffered']
    #allocation18 [shape = 's32[1]{0}', space=sflag, size = 0x4, scoped, tag = 'scoped memory for tpu_custom_call.1']
    #allocation19 [shape = 'u8[512]{0}', space=vmem, size = 0x400, scoped, tag = 'input window, operand 12, single buffered']
    #allocation20 [shape = 'u8[16384]{0}', space=vmem, size = 0x4000, scoped, tag = 'input window, operand 15, single buffered']
    #allocation21 [shape = 's32[1]{0}', space=sflag, size = 0x4, scoped, tag = 'scoped memory for tpu_custom_call.1']
    #allocation22 [shape = 'u8[2048]{0}', space=vmem, size = 0x800, scoped, tag = 'input window, operand 17, single buffered']
    #allocation23 [shape = 'u8[8192]{0}', space=vmem, size = 0x2000, scoped, tag = 'output window, operand 0, single buffered']
    %25 = vsyncpa [#allocation3], 0
    %26 = vsyncpa [#allocation6], 0
    %27 = vsyncpa [#allocation9], 0
    %28 = vsyncpa [#allocation12], 0
    %29 = vsyncpa [#allocation15], 0
    %30 = vsyncpa [#allocation18], 0
    %31 = vsyncpa [#allocation21], 0
    %32 = vsyncpa [#allocation4], 0
    // Predicated region
    $region2: #{tpu_custom_call.1} parent=1 // pred_check
      _
    $region3: #{tpu_custom_call.1} parent=1 // pred_check_branch
      %34 = sbr.rel (0) target = $region5
    $region4: #{tpu_custom_call.1} parent=1 // pred_region
      %s36 = ssub.s32 256, 256
      %37 = vsyncadd [#allocation3], %s36
      %s38 = sshll.u32 [#allocation2], 4
      %s39 = int_to_ptr.vmem [resolvable:$true] %s38
      %44 = dma.hbm_to_vmem [thread:$0]  %s0, 256, %s39, [#allocation3], 128, 128, 8
    $region5: #{tpu_custom_call.1} parent=1 // pred_fallthru
      _
    // Predicated region
    $region6: #{tpu_custom_call.1} parent=1 // pred_check
      _
    $region7: #{tpu_custom_call.1} parent=1 // pred_check_branch
      %46 = sbr.rel (0) target = $region9
    $region8: #{tpu_custom_call.1} parent=1 // pred_region
      %s48 = ssub.s32 256, 256
      %49 = vsyncadd [#allocation6], %s48
      %s50 = sshll.u32 [#allocation5], 4
      %s51 = int_to_ptr.vmem [resolvable:$true] %s50
      %56 = dma.hbm_to_vmem [thread:$0]  %s1, 256, %s51, [#allocation6], 128, 128, 8
    $region9: #{tpu_custom_call.1} parent=1 // pred_fallthru
      _
    // Predicated region
    $region10: #{tpu_custom_call.1} parent=1 // pred_check
      _
    $region11: #{tpu_custom_call.1} parent=1 // pred_check_branch
      %58 = sbr.rel (0) target = $region13
    $region12: #{tpu_custom_call.1} parent=1 // pred_region
      %s60 = ssub.s32 256, 256
      %61 = vsyncadd [#allocation6], %s60
      %s62 = sshll.u32 [#allocation7], 4
      %s63 = int_to_ptr.vmem [resolvable:$true] %s62
      %68 = dma.hbm_to_vmem [thread:$0]  %s2, 256, %s63, [#allocation6], 128, 128, 8
    $region13: #{tpu_custom_call.1} parent=1 // pred_fallthru
      _
    // Predicated region
    $region14: #{tpu_custom_call.1} parent=1 // pred_check
      _
    $region15: #{tpu_custom_call.1} parent=1 // pred_check_branch
      %70 = sbr.rel (0) target = $region17
    $region16: #{tpu_custom_call.1} parent=1 // pred_region
      _
    $region17: #{tpu_custom_call.1} parent=1 // pred_fallthru
      _
    // Predicated region
    $region18: #{tpu_custom_call.1} parent=1 // pred_check
      _
    $region19: #{tpu_custom_call.1} parent=1 // pred_check_branch
      %72 = sbr.rel (0) target = $region21
    $region20: #{tpu_custom_call.1} parent=1 // pred_region
      _
    $region21: #{tpu_custom_call.1} parent=1 // pred_fallthru
      _
    // Predicated region
    $region22: #{tpu_custom_call.1} parent=1 // pred_check
      _
    $region23: #{tpu_custom_call.1} parent=1 // pred_check_branch
      %74 = sbr.rel (0) target = $region25
    $region24: #{tpu_custom_call.1} parent=1 // pred_region
      %s76 = ssub.s32 16, 16
      %77 = vsyncadd [#allocation9], %s76
      %s79 = sshll.u32 [#allocation8], 4
      %s80 = int_to_ptr.vmem [resolvable:$true] %s79
      %82 = dma.hbm_to_vmem [thread:$0]  %s5, 16, %s80, [#allocation9]
    $region25: #{tpu_custom_call.1} parent=1 // pred_fallthru
      _
    // Predicated region
    $region26: #{tpu_custom_call.1} parent=1 // pred_check
      _
    $region27: #{tpu_custom_call.1} parent=1 // pred_check_branch
      %84 = sbr.rel (0) target = $region29
    $region28: #{tpu_custom_call.1} parent=1 // pred_region
      %s86 = ssub.s32 512, 512
      %87 = vsyncadd [#allocation9], %s86
      %s88 = sshll.u32 [#allocation10], 4
      %s89 = int_to_ptr.vmem [resolvable:$true] %s88
      %94 = dma.hbm_to_vmem [thread:$0]  %s6, 512, %s89, [#allocation9], 128, 128, 8
    $region29: #{tpu_custom_call.1} parent=1 // pred_fallthru
      _
    // Predicated region
    $region30: #{tpu_custom_call.1} parent=1 // pred_check
      _
    $region31: #{tpu_custom_call.1} parent=1 // pred_check_branch
      %96 = sbr.rel (0) target = $region33
    $region32: #{tpu_custom_call.1} parent=1 // pred_region
      %s98 = ssub.s32 16, 16
      %99 = vsyncadd [#allocation12], %s98
      %s101 = sshll.u32 [#allocation11], 4
      %s102 = int_to_ptr.vmem [resolvable:$true] %s101
      %104 = dma.hbm_to_vmem [thread:$0]  %s7, 16, %s102, [#allocation12]
    $region33: #{tpu_custom_call.1} parent=1 // pred_fallthru
      _
    // Predicated region
    $region34: #{tpu_custom_call.1} parent=1 // pred_check
      _
    $region35: #{tpu_custom_call.1} parent=1 // pred_check_branch
      %106 = sbr.rel (0) target = $region37
    $region36: #{tpu_custom_call.1} parent=1 // pred_region
      %s108 = ssub.s32 256, 256
      %109 = vsyncadd [#allocation12], %s108
      %s110 = sshll.u32 [#allocation13], 4
      %s111 = int_to_ptr.vmem [resolvable:$true] %s110
      %116 = dma.hbm_to_vmem [thread:$0]  %s8, 256, %s111, [#allocation12], 128, 128, 8
    $region37: #{tpu_custom_call.1} parent=1 // pred_fallthru
      _
    // Predicated region
    $region38: #{tpu_custom_call.1} parent=1 // pred_check
      _
    $region39: #{tpu_custom_call.1} parent=1 // pred_check_branch
      %118 = sbr.rel (0) target = $region41
    $region40: #{tpu_custom_call.1} parent=1 // pred_region
      %s120 = ssub.s32 512, 512
      %121 = vsyncadd [#allocation15], %s120
      %s122 = sshll.u32 [#allocation14], 4
      %s123 = int_to_ptr.vmem [resolvable:$true] %s122
      %128 = dma.hbm_to_vmem [thread:$0]  %s9, 512, %s123, [#allocation15], 128, 128, 8
    $region41: #{tpu_custom_call.1} parent=1 // pred_fallthru
      _
    // Predicated region
    $region42: #{tpu_custom_call.1} parent=1 // pred_check
      _
    $region43: #{tpu_custom_call.1} parent=1 // pred_check_branch
      %130 = sbr.rel (0) target = $region45
    $region44: #{tpu_custom_call.1} parent=1 // pred_region
      %s132 = ssub.s32 16, 16
      %133 = vsyncadd [#allocation15], %s132
      %s135 = sshll.u32 [#allocation16], 4
      %s136 = int_to_ptr.vmem [resolvable:$true] %s135
      %138 = dma.hbm_to_vmem [thread:$0]  %s10, 16, %s136, [#allocation15]
    $region45: #{tpu_custom_call.1} parent=1 // pred_fallthru
      _
    // Predicated region
    $region46: #{tpu_custom_call.1} parent=1 // pred_check
      _
    $region47: #{tpu_custom_call.1} parent=1 // pred_check_branch
      %140 = sbr.rel (0) target = $region49
    $region48: #{tpu_custom_call.1} parent=1 // pred_region
      %s142 = ssub.s32 2048, 2048
      %143 = vsyncadd [#allocation18], %s142
      %s144 = sshll.u32 [#allocation17], 4
      %s145 = int_to_ptr.vmem [resolvable:$true] %s144
      %150 = dma.hbm_to_vmem [thread:$0]  %s11, 2048, %s145, [#allocation18], 128, 128, 8
    $region49: #{tpu_custom_call.1} parent=1 // pred_fallthru
      _
    // Predicated region
    $region50: #{tpu_custom_call.1} parent=1 // pred_check
      _
    $region51: #{tpu_custom_call.1} parent=1 // pred_check_branch
      %152 = sbr.rel (0) target = $region53
    $region52: #{tpu_custom_call.1} parent=1 // pred_region
      %s154 = ssub.s32 16, 16
      %155 = vsyncadd [#allocation18], %s154
      %s157 = sshll.u32 [#allocation19], 4
      %s158 = int_to_ptr.vmem [resolvable:$true] %s157
      %160 = dma.hbm_to_vmem [thread:$0]  %s12, 16, %s158, [#allocation18]
    $region53: #{tpu_custom_call.1} parent=1 // pred_fallthru
      _
    // Predicated region
    $region54: #{tpu_custom_call.1} parent=1 // pred_check
      _
    $region55: #{tpu_custom_call.1} parent=1 // pred_check_branch
      %162 = sbr.rel (0) target = $region57
    $region56: #{tpu_custom_call.1} parent=1 // pred_region
      _
    $region57: #{tpu_custom_call.1} parent=1 // pred_fallthru
      _
    // Predicated region
    $region58: #{tpu_custom_call.1} parent=1 // pred_check
      _
    $region59: #{tpu_custom_call.1} parent=1 // pred_check_branch
      %164 = sbr.rel (0) target = $region61
    $region60: #{tpu_custom_call.1} parent=1 // pred_region
      _
    $region61: #{tpu_custom_call.1} parent=1 // pred_fallthru
      _
    // Predicated region
    $region62: #{tpu_custom_call.1} parent=1 // pred_check
      _
    $region63: #{tpu_custom_call.1} parent=1 // pred_check_branch
      %166 = sbr.rel (0) target = $region65
    $region64: #{tpu_custom_call.1} parent=1 // pred_region
      %s168 = ssub.s32 512, 512
      %169 = vsyncadd [#allocation21], %s168
      %s170 = sshll.u32 [#allocation20], 4
      %s171 = int_to_ptr.vmem [resolvable:$true] %s170
      %176 = dma.hbm_to_vmem [thread:$0]  %s15, 512, %s171, [#allocation21], 128, 128, 8
    $region65: #{tpu_custom_call.1} parent=1 // pred_fallthru
      _
    // Predicated region
    $region66: #{tpu_custom_call.1} parent=1 // pred_check
      _
    $region67: #{tpu_custom_call.1} parent=1 // pred_check_branch
      %178 = sbr.rel (0) target = $region69
    $region68: #{tpu_custom_call.1} parent=1 // pred_region
      _
    $region69: #{tpu_custom_call.1} parent=1 // pred_fallthru
      _
    // Predicated region
    $region70: #{tpu_custom_call.1} parent=1 // pred_check
      _
    $region71: #{tpu_custom_call.1} parent=1 // pred_check_branch
      %180 = sbr.rel (0) target = $region73
    $region72: #{tpu_custom_call.1} parent=1 // pred_region
      %s182 = ssub.s32 64, 64
      %183 = vsyncadd [#allocation21], %s182
      %s185 = sshll.u32 [#allocation22], 4
      %s186 = int_to_ptr.vmem [resolvable:$true] %s185
      %188 = dma.hbm_to_vmem [thread:$0]  %s17, 64, %s186, [#allocation21]
    $region73: #{tpu_custom_call.1} parent=1 // pred_fallthru
      _
    // Predicated region
    $region74: #{tpu_custom_call.1} parent=1 // pred_check
      _
    $region75: #{tpu_custom_call.1} parent=1 // pred_check_branch
      %190 = sbr.rel (0) target = $region77
    $region76: #{tpu_custom_call.1} parent=1 // pred_region
      _
    $region77: #{tpu_custom_call.1} parent=1 // pred_fallthru
      _
    // Predicated region
    $region78: #{tpu_custom_call.1} parent=1 // pred_check
      _
    $region79: #{tpu_custom_call.1} parent=1 // pred_check_branch
      %192 = sbr.rel (0) target = $region81
    $region80: #{tpu_custom_call.1} parent=1 // pred_region
      _
    $region81: #{tpu_custom_call.1} parent=1 // pred_fallthru
      _
    // Predicated region
    $region82: #{tpu_custom_call.1} parent=1 // pred_check
      _
    $region83: #{tpu_custom_call.1} parent=1 // pred_check_branch
      %194 = sbr.rel (0) target = $region85
    $region84: #{tpu_custom_call.1} parent=1 // pred_region
      %195 = dma.done [#allocation3], 256
    $region85: #{tpu_custom_call.1} parent=1 // pred_fallthru
      _
    // Predicated region
    $region86: #{tpu_custom_call.1} parent=1 // pred_check
      _
    $region87: #{tpu_custom_call.1} parent=1 // pred_check_branch
      %197 = sbr.rel (0) target = $region89
    $region88: #{tpu_custom_call.1} parent=1 // pred_region
      %198 = dma.done [#allocation6], 256
    $region89: #{tpu_custom_call.1} parent=1 // pred_fallthru
      _
    // Predicated region
    $region90: #{tpu_custom_call.1} parent=1 // pred_check
      _
    $region91: #{tpu_custom_call.1} parent=1 // pred_check_branch
      %200 = sbr.rel (0) target = $region93
    $region92: #{tpu_custom_call.1} parent=1 // pred_region
      %201 = dma.done [#allocation6], 256
    $region93: #{tpu_custom_call.1} parent=1 // pred_fallthru
      _
    // Predicated region
    $region94: #{tpu_custom_call.1} parent=1 // pred_check
      _
    $region95: #{tpu_custom_call.1} parent=1 // pred_check_branch
      %203 = sbr.rel (0) target = $region97
    $region96: #{tpu_custom_call.1} parent=1 // pred_region
      %204 = dma.done [#allocation9], 16
    $region97: #{tpu_custom_call.1} parent=1 // pred_fallthru
      _
    // Predicated region
    $region98: #{tpu_custom_call.1} parent=1 // pred_check
      _
    $region99: #{tpu_custom_call.1} parent=1 // pred_check_branch
      %206 = sbr.rel (0) target = $region101
    $region100: #{tpu_custom_call.1} parent=1 // pred_region
      %207 = dma.done [#allocation9], 512
    $region101: #{tpu_custom_call.1} parent=1 // pred_fallthru
      _
    // Predicated region
    $region102: #{tpu_custom_call.1} parent=1 // pred_check
      _
    $region103: #{tpu_custom_call.1} parent=1 // pred_check_branch
      %209 = sbr.rel (0) target = $region105
    $region104: #{tpu_custom_call.1} parent=1 // pred_region
      %210 = dma.done [#allocation12], 16
    $region105: #{tpu_custom_call.1} parent=1 // pred_fallthru
      _
    // Predicated region
    $region106: #{tpu_custom_call.1} parent=1 // pred_check
      _
    $region107: #{tpu_custom_call.1} parent=1 // pred_check_branch
      %212 = sbr.rel (0) target = $region109
    $region108: #{tpu_custom_call.1} parent=1 // pred_region
      %213 = dma.done [#allocation12], 256
    $region109: #{tpu_custom_call.1} parent=1 // pred_fallthru
      _
    // Predicated region
    $region110: #{tpu_custom_call.1} parent=1 // pred_check
      _
    $region111: #{tpu_custom_call.1} parent=1 // pred_check_branch
      %215 = sbr.rel (0) target = $region113
    $region112: #{tpu_custom_call.1} parent=1 // pred_region
      %216 = dma.done [#allocation15], 512
    $region113: #{tpu_custom_call.1} parent=1 // pred_fallthru
      _
    // Predicated region
    $region114: #{tpu_custom_call.1} parent=1 // pred_check
      _
    $region115: #{tpu_custom_call.1} parent=1 // pred_check_branch
      %218 = sbr.rel (0) target = $region117
    $region116: #{tpu_custom_call.1} parent=1 // pred_region
      %219 = dma.done [#allocation15], 16
    $region117: #{tpu_custom_call.1} parent=1 // pred_fallthru
      _
    // Predicated region
    $region118: #{tpu_custom_call.1} parent=1 // pred_check
      _
    $region119: #{tpu_custom_call.1} parent=1 // pred_check_branch
      %221 = sbr.rel (0) target = $region121
    $region120: #{tpu_custom_call.1} parent=1 // pred_region
      %222 = dma.done [#allocation18], 2048
    $region121: #{tpu_custom_call.1} parent=1 // pred_fallthru
      _
    // Predicated region
    $region122: #{tpu_custom_call.1} parent=1 // pred_check
      _
    $region123: #{tpu_custom_call.1} parent=1 // pred_check_branch
      %224 = sbr.rel (0) target = $region125
    $region124: #{tpu_custom_call.1} parent=1 // pred_region
      %225 = dma.done [#allocation18], 16
    $region125: #{tpu_custom_call.1} parent=1 // pred_fallthru
      _
    // Predicated region
    $region126: #{tpu_custom_call.1} parent=1 // pred_check
      _
    $region127: #{tpu_custom_call.1} parent=1 // pred_check_branch
      %227 = sbr.rel (0) target = $region129
    $region128: #{tpu_custom_call.1} parent=1 // pred_region
      %228 = dma.done [#allocation21], 512
    $region129: #{tpu_custom_call.1} parent=1 // pred_fallthru
      _
    // Predicated region
    $region130: #{tpu_custom_call.1} parent=1 // pred_check
      _
    $region131: #{tpu_custom_call.1} parent=1 // pred_check_branch
      %230 = sbr.rel (0) target = $region133
    $region132: #{tpu_custom_call.1} parent=1 // pred_region
      %231 = dma.done [#allocation21], 64
    $region133: #{tpu_custom_call.1} parent=1 // pred_fallthru
      _
    %v232 = vld [vmem:[#allocation2] sm:$0xff]
    %v233 = vld [vmem:[#allocation2 + $0x8] sm:$0xff]
    %v234 = vld [vmem:[#allocation7] sm:$0xff]
    %v235 = vld [vmem:[#allocation7 + $0x8] sm:$0xf]
    %v236 = vld [vmem:[%s3] sm:$0x1]
    %v238 = vlaneseq
    %v239 = vshrl.u32 %v238, 7
    %v240 = vsub.s32 0, %v239
    %v241 = vrot.slane %v236, %v240
    %vm243 = vcmask 97280
    %v245 = vsel %vm243, %v232, 0
    %v248 = vsel %vm243, %v233, 0
    %vm250 = vcmask 1043456
    %v252 = vsel %vm250, %v235, 0
    %254 = vmatprep.subr.mxu0 0.0
    %255 = vmatpush1.msra.mxu0 0.0
    %256 = vmatprep.subr.mxu0 0.0
    %257 = vmatpush1.msra.mxu0 0.0
    %258 = vmatprep.subr.mxu0 0.0
    %259 = vmatpush1.msra.mxu0 0.0
    %260 = vmatprep.subr.mxu0 0.0
    %261 = vmatpush1.msra.mxu0 0.0
    %262 = vmatprep.subr.mxu0 0.0
    %263 = vmatpush1.msra.mxu0 0.0
    %264 = vmatprep.subr.mxu0 0.0
    %265 = vmatpush1.msra.mxu0 0.0
    %266 = vmatprep.subr.mxu0 0.0
    %267 = vmatpush1.msra.mxu0 0.0
    %268 = vmatprep.subr.mxu0 0.0
    %269 = vmatpush1.msra.mxu0 0.0
    %270 = vmatprep.subr.mxu0 0.0
    %271 = vmatpush1.msra.mxu0 0.0
    %272 = vmatprep.subr.mxu0 0.0
    %273 = vmatpush1.msra.mxu0 0.0
    %274 = vmatprep.subr.mxu0 0.0
    %275 = vmatpush1.msra.mxu0 0.0
    %276 = vmatprep.subr.mxu0 0.0
    %277 = vmatpush1.msra.mxu0 0.0
    %278 = vmatprep.subr.mxu0 0.0
    %279 = vmatpush1.msra.mxu0 0.0
    %280 = vmatprep.subr.mxu0 0.0
    %281 = vmatpush1.msra.mxu0 0.0
    %282 = vmatprep.subr.mxu0 0.0
    %283 = vmatpush1.msra.mxu0 %v252
    %284 = vmatprep.subr.mxu0 0.0
    %285 = vmatpush1.msra.mxu0 %v234
    %286 = vmatprep.subr.mxu0 0.0
    %287 = vmatpush2.msra.mxu0 0.0
    %288 = vmatprep.subr.mxu0 0.0
    %289 = vmatpush2.msra.mxu0 0.0
    %290 = vmatprep.subr.mxu0 0.0
    %291 = vmatpush2.msra.mxu0 0.0
    %292 = vmatprep.subr.mxu0 0.0
    %293 = vmatpush2.msra.mxu0 0.0
    %294 = vmatprep.subr.mxu0 0.0
    %295 = vmatpush2.msra.mxu0 0.0
    %296 = vmatprep.subr.mxu0 0.0
    %297 = vmatpush2.msra.mxu0 0.0
    %298 = vmatprep.subr.mxu0 0.0
    %299 = vmatpush2.msra.mxu0 0.0
    %300 = vmatprep.subr.mxu0 0.0
    %301 = vmatpush2.msra.mxu0 0.0
    %302 = vmatprep.subr.mxu0 0.0
    %303 = vmatpush2.msra.mxu0 0.0
    %304 = vmatprep.subr.mxu0 0.0
    %305 = vmatpush2.msra.mxu0 0.0
    %306 = vmatprep.subr.mxu0 0.0
    %307 = vmatpush2.msra.mxu0 0.0
    %308 = vmatprep.subr.mxu0 0.0
    %309 = vmatpush2.msra.mxu0 0.0
    %310 = vmatprep.subr.mxu0 0.0
    %311 = vmatpush2.msra.mxu0 0.0
    %312 = vmatprep.subr.mxu0 0.0
    %313 = vmatpush2.msra.mxu0 0.0
    %314 = vmatprep.subr.mxu0 0.0
    %315 = vmatpush2.msra.mxu0 0.0
    %316 = vmatprep.subr.mxu0 0.0
    %317 = vmatpush2.msra.mxu0 0.0
    %318 = vmatprep.mubr.f32.mxu0 0.0
    %319 = vmatmul.mubr.f32.gmra.mxu0 %v245
    %v320 = vpop.f32.mrf.mxu0
    %v321 = vadd.f32 %v241, %v320
    %v322 = vpop.f32.mrf.mxu0
    %323 = vmatprep.mubr.f32.mxu0 0.0
    %324 = vmatmul.mubr.f32.gmra.mxu0 %v248
    %v325 = vpop.f32.mrf.mxu0
    %v326 = vadd.f32 %v241, %v325
    %v327 = vpop.f32.mrf.mxu0
    %328 = vdwg.mxu0
    %v329 = vmax.f32 %v321, 0.0
    %v330 = vmax.f32 %v326, 0.0
    %v331 = vld [vmem:[%s4] sm:$0xff]
    %v332 = vld [vmem:[%s4 + $0x8] sm:$0xff]
    %v333 = vld [vmem:[%s4 + $0x10] sm:$0xff]
    %v334 = vld [vmem:[%s4 + $0x18] sm:$0xff]
    %v335 = vld [vmem:[#allocation8] sm:$0x1]
    %v337 = vlaneseq
    %v338 = vshrl.u32 %v337, 7
    %v339 = vsub.s32 0, %v338
    %v340 = vrot.slane %v335, %v339
    %vm342 = vcmask 261120
    %v344 = vsel %vm342, %v329, 0
    %v347 = vsel %vm342, %v330, 0
    %349 = vmatprep.subr.mxu0 0.0
    %350 = vmatpush1.msra.mxu0 0.0
    %351 = vmatprep.subr.mxu0 0.0
    %352 = vmatpush1.msra.mxu0 0.0
    %353 = vmatprep.subr.mxu0 0.0
    %354 = vmatpush1.msra.mxu0 0.0
    %355 = vmatprep.subr.mxu0 0.0
    %356 = vmatpush1.msra.mxu0 0.0
    %357 = vmatprep.subr.mxu0 0.0
    %358 = vmatpush1.msra.mxu0 0.0
    %359 = vmatprep.subr.mxu0 0.0
    %360 = vmatpush1.msra.mxu0 0.0
    %361 = vmatprep.subr.mxu0 0.0
    %362 = vmatpush1.msra.mxu0 0.0
    %363 = vmatprep.subr.mxu0 0.0
    %364 = vmatpush1.msra.mxu0 0.0
    %365 = vmatprep.subr.mxu0 0.0
    %366 = vmatpush1.msra.mxu0 0.0
    %367 = vmatprep.subr.mxu0 0.0
    %368 = vmatpush1.msra.mxu0 0.0
    %369 = vmatprep.subr.mxu0 0.0
    %370 = vmatpush1.msra.mxu0 0.0
    %371 = vmatprep.subr.mxu0 0.0
    %372 = vmatpush1.msra.mxu0 0.0
    %373 = vmatprep.subr.mxu0 0.0
    %374 = vmatpush1.msra.mxu0 %v334
    %375 = vmatprep.subr.mxu0 0.0
    %376 = vmatpush1.msra.mxu0 %v333
    %377 = vmatprep.subr.mxu0 0.0
    %378 = vmatpush1.msra.mxu0 %v332
    %379 = vmatprep.subr.mxu0 0.0
    %380 = vmatpush1.msra.mxu0 %v331
    %381 = vmatprep.subr.mxu0 0.0
    %382 = vmatpush2.msra.mxu0 0.0
    %383 = vmatprep.subr.mxu0 0.0
    %384 = vmatpush2.msra.mxu0 0.0
    %385 = vmatprep.subr.mxu0 0.0
    %386 = vmatpush2.msra.mxu0 0.0
    %387 = vmatprep.subr.mxu0 0.0
    %388 = vmatpush2.msra.mxu0 0.0
    %389 = vmatprep.subr.mxu0 0.0
    %390 = vmatpush2.msra.mxu0 0.0
    %391 = vmatprep.subr.mxu0 0.0
    %392 = vmatpush2.msra.mxu0 0.0
    %393 = vmatprep.subr.mxu0 0.0
    %394 = vmatpush2.msra.mxu0 0.0
    %395 = vmatprep.subr.mxu0 0.0
    %396 = vmatpush2.msra.mxu0 0.0
    %397 = vmatprep.subr.mxu0 0.0
    %398 = vmatpush2.msra.mxu0 0.0
    %399 = vmatprep.subr.mxu0 0.0
    %400 = vmatpush2.msra.mxu0 0.0
    %401 = vmatprep.subr.mxu0 0.0
    %402 = vmatpush2.msra.mxu0 0.0
    %403 = vmatprep.subr.mxu0 0.0
    %404 = vmatpush2.msra.mxu0 0.0
    %405 = vmatprep.subr.mxu0 0.0
    %406 = vmatpush2.msra.mxu0 0.0
    %407 = vmatprep.subr.mxu0 0.0
    %408 = vmatpush2.msra.mxu0 0.0
    %409 = vmatprep.subr.mxu0 0.0
    %410 = vmatpush2.msra.mxu0 0.0
    %411 = vmatprep.subr.mxu0 0.0
    %412 = vmatpush2.msra.mxu0 0.0
    %413 = vmatprep.mubr.f32.mxu0 0.0
    %414 = vmatmul.mubr.f32.gmra.mxu0 %v344
    %v415 = vpop.f32.mrf.mxu0
    %v416 = vadd.f32 %v340, %v415
    %v417 = vpop.f32.mrf.mxu0
    %418 = vmatprep.mubr.f32.mxu0 0.0
    %419 = vmatmul.mubr.f32.gmra.mxu0 %v347
    %v420 = vpop.f32.mrf.mxu0
    %v421 = vadd.f32 %v340, %v420
    %v422 = vpop.f32.mrf.mxu0
    %423 = vdwg.mxu0
    %v424 = vmax.f32 %v416, 0.0
    %v425 = vmax.f32 %v421, 0.0
    %v426 = vld [vmem:[#allocation10] sm:$0xff]
    %v427 = vld [vmem:[#allocation10 + $0x8] sm:$0xff]
    %v428 = vld [vmem:[#allocation10 + $0x10] sm:$0xff]
    %v429 = vld [vmem:[#allocation10 + $0x18] sm:$0xff]
    %v430 = vld [vmem:[#allocation11] sm:$0x1]
    %v432 = vlaneseq
    %v433 = vshrl.u32 %v432, 7
    %v434 = vsub.s32 0, %v433
    %v435 = vrot.slane %v430, %v434
    %v438 = vsel %vm342, %v424, 0
    %v441 = vsel %vm342, %v425, 0
    %443 = vmatprep.subr.mxu0 0.0
    %444 = vmatpush1.msra.mxu0 0.0
    %445 = vmatprep.subr.mxu0 0.0
    %446 = vmatpush1.msra.mxu0 0.0
    %447 = vmatprep.subr.mxu0 0.0
    %448 = vmatpush1.msra.mxu0 0.0
    %449 = vmatprep.subr.mxu0 0.0
    %450 = vmatpush1.msra.mxu0 0.0
    %451 = vmatprep.subr.mxu0 0.0
    %452 = vmatpush1.msra.mxu0 0.0
    %453 = vmatprep.subr.mxu0 0.0
    %454 = vmatpush1.msra.mxu0 0.0
    %455 = vmatprep.subr.mxu0 0.0
    %456 = vmatpush1.msra.mxu0 0.0
    %457 = vmatprep.subr.mxu0 0.0
    %458 = vmatpush1.msra.mxu0 0.0
    %459 = vmatprep.subr.mxu0 0.0
    %460 = vmatpush1.msra.mxu0 0.0
    %461 = vmatprep.subr.mxu0 0.0
    %462 = vmatpush1.msra.mxu0 0.0
    %463 = vmatprep.subr.mxu0 0.0
    %464 = vmatpush1.msra.mxu0 0.0
    %465 = vmatprep.subr.mxu0 0.0
    %466 = vmatpush1.msra.mxu0 0.0
    %467 = vmatprep.subr.mxu0 0.0
    %468 = vmatpush1.msra.mxu0 %v429
    %469 = vmatprep.subr.mxu0 0.0
    %470 = vmatpush1.msra.mxu0 %v428
    %471 = vmatprep.subr.mxu0 0.0
    %472 = vmatpush1.msra.mxu0 %v427
    %473 = vmatprep.subr.mxu0 0.0
    %474 = vmatpush1.msra.mxu0 %v426
    %475 = vmatprep.subr.mxu0 0.0
    %476 = vmatpush2.msra.mxu0 0.0
    %477 = vmatprep.subr.mxu0 0.0
    %478 = vmatpush2.msra.mxu0 0.0
    %479 = vmatprep.subr.mxu0 0.0
    %480 = vmatpush2.msra.mxu0 0.0
    %481 = vmatprep.subr.mxu0 0.0
    %482 = vmatpush2.msra.mxu0 0.0
    %483 = vmatprep.subr.mxu0 0.0
    %484 = vmatpush2.msra.mxu0 0.0
    %485 = vmatprep.subr.mxu0 0.0
    %486 = vmatpush2.msra.mxu0 0.0
    %487 = vmatprep.subr.mxu0 0.0
    %488 = vmatpush2.msra.mxu0 0.0
    %489 = vmatprep.subr.mxu0 0.0
    %490 = vmatpush2.msra.mxu0 0.0
    %491 = vmatprep.subr.mxu0 0.0
    %492 = vmatpush2.msra.mxu0 0.0
    %493 = vmatprep.subr.mxu0 0.0
    %494 = vmatpush2.msra.mxu0 0.0
    %495 = vmatprep.subr.mxu0 0.0
    %496 = vmatpush2.msra.mxu0 0.0
    %497 = vmatprep.subr.mxu0 0.0
    %498 = vmatpush2.msra.mxu0 0.0
    %499 = vmatprep.subr.mxu0 0.0
    %500 = vmatpush2.msra.mxu0 0.0
    %501 = vmatprep.subr.mxu0 0.0
    %502 = vmatpush2.msra.mxu0 0.0
    %503 = vmatprep.subr.mxu0 0.0
    %504 = vmatpush2.msra.mxu0 0.0
    %505 = vmatprep.subr.mxu0 0.0
    %506 = vmatpush2.msra.mxu0 0.0
    %507 = vmatprep.mubr.f32.mxu0 0.0
    %508 = vmatmul.mubr.f32.gmra.mxu0 %v438
    %v509 = vpop.f32.mrf.mxu0
    %v510 = vadd.f32 %v435, %v509
    %v511 = vpop.f32.mrf.mxu0
    %512 = vmatprep.mubr.f32.mxu0 0.0
    %513 = vmatmul.mubr.f32.gmra.mxu0 %v441
    %v514 = vpop.f32.mrf.mxu0
    %v515 = vadd.f32 %v435, %v514
    %v516 = vpop.f32.mrf.mxu0
    %517 = vdwg.mxu0
    %v518 = vmax.f32 %v510, 0.0
    %v519 = vmax.f32 %v515, 0.0
    %v520 = vld [vmem:[#allocation5] sm:$0xff]
    %v521 = vld [vmem:[#allocation5 + $0x8] sm:$0xff]
    %v522 = vld [vmem:[#allocation13] sm:$0xff]
    %v523 = vld [vmem:[#allocation13 + $0x8] sm:$0x3]
    %vm524 = vcmask 80896
    %v526 = vsel %vm524, %v520, 0
    %v529 = vsel %vm524, %v521, 0
    %vm531 = vcmask 1041408
    %v533 = vsel %vm531, %v523, 0
    %535 = vmatprep.subr.mxu0 0.0
    %536 = vmatpush1.msra.mxu0 0.0
    %537 = vmatprep.subr.mxu0 0.0
    %538 = vmatpush1.msra.mxu0 0.0
    %539 = vmatprep.subr.mxu0 0.0
    %540 = vmatpush1.msra.mxu0 0.0
    %541 = vmatprep.subr.mxu0 0.0
    %542 = vmatpush1.msra.mxu0 0.0
    %543 = vmatprep.subr.mxu0 0.0
    %544 = vmatpush1.msra.mxu0 0.0
    %545 = vmatprep.subr.mxu0 0.0
    %546 = vmatpush1.msra.mxu0 0.0
    %547 = vmatprep.subr.mxu0 0.0
    %548 = vmatpush1.msra.mxu0 0.0
    %549 = vmatprep.subr.mxu0 0.0
    %550 = vmatpush1.msra.mxu0 0.0
    %551 = vmatprep.subr.mxu0 0.0
    %552 = vmatpush1.msra.mxu0 0.0
    %553 = vmatprep.subr.mxu0 0.0
    %554 = vmatpush1.msra.mxu0 0.0
    %555 = vmatprep.subr.mxu0 0.0
    %556 = vmatpush1.msra.mxu0 0.0
    %557 = vmatprep.subr.mxu0 0.0
    %558 = vmatpush1.msra.mxu0 0.0
    %559 = vmatprep.subr.mxu0 0.0
    %560 = vmatpush1.msra.mxu0 0.0
    %561 = vmatprep.subr.mxu0 0.0
    %562 = vmatpush1.msra.mxu0 0.0
    %563 = vmatprep.subr.mxu0 0.0
    %564 = vmatpush1.msra.mxu0 %v533
    %565 = vmatprep.subr.mxu0 0.0
    %566 = vmatpush1.msra.mxu0 %v522
    %567 = vmatprep.subr.mxu0 0.0
    %568 = vmatpush2.msra.mxu0 0.0
    %569 = vmatprep.subr.mxu0 0.0
    %570 = vmatpush2.msra.mxu0 0.0
    %571 = vmatprep.subr.mxu0 0.0
    %572 = vmatpush2.msra.mxu0 0.0
    %573 = vmatprep.subr.mxu0 0.0
    %574 = vmatpush2.msra.mxu0 0.0
    %575 = vmatprep.subr.mxu0 0.0
    %576 = vmatpush2.msra.mxu0 0.0
    %577 = vmatprep.subr.mxu0 0.0
    %578 = vmatpush2.msra.mxu0 0.0
    %579 = vmatprep.subr.mxu0 0.0
    %580 = vmatpush2.msra.mxu0 0.0
    %581 = vmatprep.subr.mxu0 0.0
    %582 = vmatpush2.msra.mxu0 0.0
    %583 = vmatprep.subr.mxu0 0.0
    %584 = vmatpush2.msra.mxu0 0.0
    %585 = vmatprep.subr.mxu0 0.0
    %586 = vmatpush2.msra.mxu0 0.0
    %587 = vmatprep.subr.mxu0 0.0
    %588 = vmatpush2.msra.mxu0 0.0
    %589 = vmatprep.subr.mxu0 0.0
    %590 = vmatpush2.msra.mxu0 0.0
    %591 = vmatprep.subr.mxu0 0.0
    %592 = vmatpush2.msra.mxu0 0.0
    %593 = vmatprep.subr.mxu0 0.0
    %594 = vmatpush2.msra.mxu0 0.0
    %595 = vmatprep.subr.mxu0 0.0
    %596 = vmatpush2.msra.mxu0 0.0
    %597 = vmatprep.subr.mxu0 0.0
    %598 = vmatpush2.msra.mxu0 0.0
    %599 = vmatprep.mubr.f32.mxu0 0.0
    %600 = vmatmul.mubr.f32.gmra.mxu0 %v526
    %v601 = vpop.f32.mrf.mxu0
    %v602 = vadd.f32 0.0, %v601
    %v603 = vpop.f32.mrf.mxu0
    %604 = vmatprep.mubr.f32.mxu0 0.0
    %605 = vmatmul.mubr.f32.gmra.mxu0 %v529
    %v606 = vpop.f32.mrf.mxu0
    %v607 = vadd.f32 0.0, %v606
    %v608 = vpop.f32.mrf.mxu0
    %609 = vdwg.mxu0
    %v610 = vld [vmem:[#allocation14] sm:$0xff]
    %v611 = vld [vmem:[#allocation14 + $0x8] sm:$0xff]
    %v612 = vld [vmem:[#allocation14 + $0x10] sm:$0xff]
    %v613 = vld [vmem:[#allocation14 + $0x18] sm:$0xff]
    %v614 = vld [vmem:[#allocation16] sm:$0x1]
    %v616 = vlaneseq
    %v617 = vshrl.u32 %v616, 7
    %v618 = vsub.s32 0, %v617
    %v619 = vrot.slane %v614, %v618
    %v622 = vsel %vm342, %v518, 0
    %v625 = vsel %vm342, %v519, 0
    %627 = vmatprep.subr.mxu0 0.0
    %628 = vmatpush1.msra.mxu0 0.0
    %629 = vmatprep.subr.mxu0 0.0
    %630 = vmatpush1.msra.mxu0 0.0
    %631 = vmatprep.subr.mxu0 0.0
    %632 = vmatpush1.msra.mxu0 0.0
    %633 = vmatprep.subr.mxu0 0.0
    %634 = vmatpush1.msra.mxu0 0.0
    %635 = vmatprep.subr.mxu0 0.0
    %636 = vmatpush1.msra.mxu0 0.0
    %637 = vmatprep.subr.mxu0 0.0
    %638 = vmatpush1.msra.mxu0 0.0
    %639 = vmatprep.subr.mxu0 0.0
    %640 = vmatpush1.msra.mxu0 0.0
    %641 = vmatprep.subr.mxu0 0.0
    %642 = vmatpush1.msra.mxu0 0.0
    %643 = vmatprep.subr.mxu0 0.0
    %644 = vmatpush1.msra.mxu0 0.0
    %645 = vmatprep.subr.mxu0 0.0
    %646 = vmatpush1.msra.mxu0 0.0
    %647 = vmatprep.subr.mxu0 0.0
    %648 = vmatpush1.msra.mxu0 0.0
    %649 = vmatprep.subr.mxu0 0.0
    %650 = vmatpush1.msra.mxu0 0.0
    %651 = vmatprep.subr.mxu0 0.0
    %652 = vmatpush1.msra.mxu0 %v613
    %653 = vmatprep.subr.mxu0 0.0
    %654 = vmatpush1.msra.mxu0 %v612
    %655 = vmatprep.subr.mxu0 0.0
    %656 = vmatpush1.msra.mxu0 %v611
    %657 = vmatprep.subr.mxu0 0.0
    %658 = vmatpush1.msra.mxu0 %v610
    %659 = vmatprep.subr.mxu0 0.0
    %660 = vmatpush2.msra.mxu0 0.0
    %661 = vmatprep.subr.mxu0 0.0
    %662 = vmatpush2.msra.mxu0 0.0
    %663 = vmatprep.subr.mxu0 0.0
    %664 = vmatpush2.msra.mxu0 0.0
    %665 = vmatprep.subr.mxu0 0.0
    %666 = vmatpush2.msra.mxu0 0.0
    %667 = vmatprep.subr.mxu0 0.0
    %668 = vmatpush2.msra.mxu0 0.0
    %669 = vmatprep.subr.mxu0 0.0
    %670 = vmatpush2.msra.mxu0 0.0
    %671 = vmatprep.subr.mxu0 0.0
    %672 = vmatpush2.msra.mxu0 0.0
    %673 = vmatprep.subr.mxu0 0.0
    %674 = vmatpush2.msra.mxu0 0.0
    %675 = vmatprep.subr.mxu0 0.0
    %676 = vmatpush2.msra.mxu0 0.0
    %677 = vmatprep.subr.mxu0 0.0
    %678 = vmatpush2.msra.mxu0 0.0
    %679 = vmatprep.subr.mxu0 0.0
    %680 = vmatpush2.msra.mxu0 0.0
    %681 = vmatprep.subr.mxu0 0.0
    %682 = vmatpush2.msra.mxu0 0.0
    %683 = vmatprep.subr.mxu0 0.0
    %684 = vmatpush2.msra.mxu0 0.0
    %685 = vmatprep.subr.mxu0 0.0
    %686 = vmatpush2.msra.mxu0 0.0
    %687 = vmatprep.subr.mxu0 0.0
    %688 = vmatpush2.msra.mxu0 0.0
    %689 = vmatprep.subr.mxu0 0.0
    %690 = vmatpush2.msra.mxu0 0.0
    %691 = vmatprep.mubr.f32.mxu0 0.0
    %692 = vmatmul.mubr.f32.gmra.mxu0 %v622
    %v693 = vpop.f32.mrf.mxu0
    %v694 = vadd.f32 %v619, %v693
    %v695 = vpop.f32.mrf.mxu0
    %696 = vmatprep.mubr.f32.mxu0 0.0
    %697 = vmatmul.mubr.f32.gmra.mxu0 %v625
    %v698 = vpop.f32.mrf.mxu0
    %v699 = vadd.f32 %v619, %v698
    %v700 = vpop.f32.mrf.mxu0
    %701 = vdwg.mxu0
    %v702 = vmax.f32 %v694, 0.0
    %v703 = vmax.f32 %v699, 0.0
    %v704 = vld [vmem:[#allocation17] sm:$0xff]
    %v705 = vld [vmem:[#allocation17 + $0x8] sm:$0xff]
    %v706 = vld [vmem:[#allocation17 + $0x10] sm:$0xff]
    %v707 = vld [vmem:[#allocation17 + $0x18] sm:$0xff]
    %v708 = vld [vmem:[#allocation17 + $0x20] sm:$0xff]
    %v709 = vld [vmem:[#allocation17 + $0x28] sm:$0xff]
    %v710 = vld [vmem:[#allocation17 + $0x30] sm:$0xff]
    %v711 = vld [vmem:[#allocation17 + $0x38] sm:$0xff]
    %v712 = vld [vmem:[#allocation17 + $0x40] sm:$0xff]
    %v713 = vld [vmem:[#allocation17 + $0x48] sm:$0xff]
    %v714 = vld [vmem:[#allocation17 + $0x50] sm:$0xff]
    %v715 = vld [vmem:[#allocation17 + $0x58] sm:$0xff]
    %v716 = vld [vmem:[#allocation17 + $0x60] sm:$0xff]
    %v717 = vld [vmem:[#allocation17 + $0x68] sm:$0xff]
    %v718 = vld [vmem:[#allocation17 + $0x70] sm:$0xff]
    %v719 = vld [vmem:[#allocation17 + $0x78] sm:$0xff]
    %v720 = vld [vmem:[#allocation19] sm:$0x1]
    %v722 = vlaneseq
    %v723 = vshrl.u32 %v722, 7
    %v724 = vsub.s32 0, %v723
    %v725 = vrot.slane %v720, %v724
    %727 = vmatprep.subr.mxu0 0.0
    %728 = vmatpush1.msra.mxu0 %v719
    %729 = vmatprep.subr.mxu0 0.0
    %730 = vmatpush1.msra.mxu0 %v718
    %731 = vmatprep.subr.mxu0 0.0
    %732 = vmatpush1.msra.mxu0 %v717
    %733 = vmatprep.subr.mxu0 0.0
    %734 = vmatpush1.msra.mxu0 %v716
    %735 = vmatprep.subr.mxu0 0.0
    %736 = vmatpush1.msra.mxu0 %v715
    %737 = vmatprep.subr.mxu0 0.0
    %738 = vmatpush1.msra.mxu0 %v714
    %739 = vmatprep.subr.mxu0 0.0
    %740 = vmatpush1.msra.mxu0 %v713
    %741 = vmatprep.subr.mxu0 0.0
    %742 = vmatpush1.msra.mxu0 %v712
    %743 = vmatprep.subr.mxu0 0.0
    %744 = vmatpush1.msra.mxu0 %v711
    %745 = vmatprep.subr.mxu0 0.0
    %746 = vmatpush1.msra.mxu0 %v710
    %747 = vmatprep.subr.mxu0 0.0
    %748 = vmatpush1.msra.mxu0 %v709
    %749 = vmatprep.subr.mxu0 0.0
    %750 = vmatpush1.msra.mxu0 %v708
    %751 = vmatprep.subr.mxu0 0.0
    %752 = vmatpush1.msra.mxu0 %v707
    %753 = vmatprep.subr.mxu0 0.0
    %754 = vmatpush1.msra.mxu0 %v706
    %755 = vmatprep.subr.mxu0 0.0
    %756 = vmatpush1.msra.mxu0 %v705
    %757 = vmatprep.subr.mxu0 0.0
    %758 = vmatpush1.msra.mxu0 %v704
    %759 = vmatprep.subr.mxu0 0.0
    %760 = vmatpush2.msra.mxu0 0.0
    %761 = vmatprep.subr.mxu0 0.0
    %762 = vmatpush2.msra.mxu0 0.0
    %763 = vmatprep.subr.mxu0 0.0
    %764 = vmatpush2.msra.mxu0 0.0
    %765 = vmatprep.subr.mxu0 0.0
    %766 = vmatpush2.msra.mxu0 0.0
    %767 = vmatprep.subr.mxu0 0.0
    %768 = vmatpush2.msra.mxu0 0.0
    %769 = vmatprep.subr.mxu0 0.0
    %770 = vmatpush2.msra.mxu0 0.0
    %771 = vmatprep.subr.mxu0 0.0
    %772 = vmatpush2.msra.mxu0 0.0
    %773 = vmatprep.subr.mxu0 0.0
    %774 = vmatpush2.msra.mxu0 0.0
    %775 = vmatprep.subr.mxu0 0.0
    %776 = vmatpush2.msra.mxu0 0.0
    %777 = vmatprep.subr.mxu0 0.0
    %778 = vmatpush2.msra.mxu0 0.0
    %779 = vmatprep.subr.mxu0 0.0
    %780 = vmatpush2.msra.mxu0 0.0
    %781 = vmatprep.subr.mxu0 0.0
    %782 = vmatpush2.msra.mxu0 0.0
    %783 = vmatprep.subr.mxu0 0.0
    %784 = vmatpush2.msra.mxu0 0.0
    %785 = vmatprep.subr.mxu0 0.0
    %786 = vmatpush2.msra.mxu0 0.0
    %787 = vmatprep.subr.mxu0 0.0
    %788 = vmatpush2.msra.mxu0 0.0
    %789 = vmatprep.subr.mxu0 0.0
    %790 = vmatpush2.msra.mxu0 0.0
    %791 = vmatprep.mubr.f32.mxu0 0.0
    %792 = vmatmul.mubr.f32.gmra.mxu0 %v702
    %v793 = vpop.f32.mrf.mxu0
    %v794 = vadd.f32 %v725, %v793
    %v795 = vpop.f32.mrf.mxu0
    %796 = vmatprep.mubr.f32.mxu0 0.0
    %797 = vmatmul.mubr.f32.gmra.mxu0 %v703
    %v798 = vpop.f32.mrf.mxu0
    %v799 = vadd.f32 %v725, %v798
    %v800 = vpop.f32.mrf.mxu0
    %801 = vdwg.mxu0
    %v802 = vmax.f32 %v794, 0.0
    %v803 = vmax.f32 %v799, 0.0
    %v804 = vld [vmem:[%s13] sm:$0xff]
    %v805 = vld [vmem:[%s13 + $0x8] sm:$0xff]
    %v806 = vld [vmem:[%s13 + $0x10] sm:$0xff]
    %v807 = vld [vmem:[%s13 + $0x18] sm:$0xff]
    %v808 = vld [vmem:[%s13 + $0x20] sm:$0xff]
    %v809 = vld [vmem:[%s13 + $0x28] sm:$0xff]
    %v810 = vld [vmem:[%s13 + $0x30] sm:$0xff]
    %v811 = vld [vmem:[%s13 + $0x38] sm:$0xff]
    %v812 = vld [vmem:[%s13 + $0x40] sm:$0xff]
    %v813 = vld [vmem:[%s13 + $0x48] sm:$0xff]
    %v814 = vld [vmem:[%s13 + $0x50] sm:$0xff]
    %v815 = vld [vmem:[%s13 + $0x58] sm:$0xff]
    %v816 = vld [vmem:[%s13 + $0x60] sm:$0xff]
    %v817 = vld [vmem:[%s13 + $0x68] sm:$0xff]
    %v818 = vld [vmem:[%s13 + $0x70] sm:$0xff]
    %v819 = vld [vmem:[%s13 + $0x78] sm:$0xff]
    %v820 = vld [vmem:[%s13 + $0x80] sm:$0xff]
    %v821 = vld [vmem:[%s13 + $0x88] sm:$0xff]
    %v822 = vld [vmem:[%s13 + $0x90] sm:$0xff]
    %v823 = vld [vmem:[%s13 + $0x98] sm:$0xff]
    %v824 = vld [vmem:[%s13 + $0xa0] sm:$0xff]
    %v825 = vld [vmem:[%s13 + $0xa8] sm:$0xff]
    %v826 = vld [vmem:[%s13 + $0xb0] sm:$0xff]
    %v827 = vld [vmem:[%s13 + $0xb8] sm:$0xff]
    %v828 = vld [vmem:[%s13 + $0xc0] sm:$0xff]
    %v829 = vld [vmem:[%s13 + $0xc8] sm:$0xff]
    %v830 = vld [vmem:[%s13 + $0xd0] sm:$0xff]
    %v831 = vld [vmem:[%s13 + $0xd8] sm:$0xff]
    %v832 = vld [vmem:[%s13 + $0xe0] sm:$0xff]
    %v833 = vld [vmem:[%s13 + $0xe8] sm:$0xff]
    %v834 = vld [vmem:[%s13 + $0xf0] sm:$0xff]
    %v835 = vld [vmem:[%s13 + $0xf8] sm:$0xff]
    %836 = vmatprep.subr.mxu0 %v835
    %837 = vmatpush1.msra.mxu0 %v834
    %838 = vmatprep.subr.mxu0 %v833
    %839 = vmatpush1.msra.mxu0 %v832
    %840 = vmatprep.subr.mxu0 %v831
    %841 = vmatpush1.msra.mxu0 %v830
    %842 = vmatprep.subr.mxu0 %v829
    %843 = vmatpush1.msra.mxu0 %v828
    %844 = vmatprep.subr.mxu0 %v827
    %845 = vmatpush1.msra.mxu0 %v826
    %846 = vmatprep.subr.mxu0 %v825
    %847 = vmatpush1.msra.mxu0 %v824
    %848 = vmatprep.subr.mxu0 %v823
    %849 = vmatpush1.msra.mxu0 %v822
    %850 = vmatprep.subr.mxu0 %v821
    %851 = vmatpush1.msra.mxu0 %v820
    %852 = vmatprep.subr.mxu0 %v819
    %853 = vmatpush1.msra.mxu0 %v818
    %854 = vmatprep.subr.mxu0 %v817
    %855 = vmatpush1.msra.mxu0 %v816
    %856 = vmatprep.subr.mxu0 %v815
    %857 = vmatpush1.msra.mxu0 %v814
    %858 = vmatprep.subr.mxu0 %v813
    %859 = vmatpush1.msra.mxu0 %v812
    %860 = vmatprep.subr.mxu0 %v811
    %861 = vmatpush1.msra.mxu0 %v810
    %862 = vmatprep.subr.mxu0 %v809
    %863 = vmatpush1.msra.mxu0 %v808
    %864 = vmatprep.subr.mxu0 %v807
    %865 = vmatpush1.msra.mxu0 %v806
    %866 = vmatprep.subr.mxu0 %v805
    %867 = vmatpush1.msra.mxu0 %v804
    %868 = vmatprep.subr.mxu0 0.0
    %869 = vmatpush2.msra.mxu0 0.0
    %870 = vmatprep.subr.mxu0 0.0
    %871 = vmatpush2.msra.mxu0 0.0
    %872 = vmatprep.subr.mxu0 0.0
    %873 = vmatpush2.msra.mxu0 0.0
    %874 = vmatprep.subr.mxu0 0.0
    %875 = vmatpush2.msra.mxu0 0.0
    %876 = vmatprep.subr.mxu0 0.0
    %877 = vmatpush2.msra.mxu0 0.0
    %878 = vmatprep.subr.mxu0 0.0
    %879 = vmatpush2.msra.mxu0 0.0
    %880 = vmatprep.subr.mxu0 0.0
    %881 = vmatpush2.msra.mxu0 0.0
    %882 = vmatprep.subr.mxu0 0.0
    %883 = vmatpush2.msra.mxu0 0.0
    %884 = vmatprep.subr.mxu0 0.0
    %885 = vmatpush2.msra.mxu0 0.0
    %886 = vmatprep.subr.mxu0 0.0
    %887 = vmatpush2.msra.mxu0 0.0
    %888 = vmatprep.subr.mxu0 0.0
    %889 = vmatpush2.msra.mxu0 0.0
    %890 = vmatprep.subr.mxu0 0.0
    %891 = vmatpush2.msra.mxu0 0.0
    %892 = vmatprep.subr.mxu0 0.0
    %893 = vmatpush2.msra.mxu0 0.0
    %894 = vmatprep.subr.mxu0 0.0
    %895 = vmatpush2.msra.mxu0 0.0
    %896 = vmatprep.subr.mxu0 0.0
    %897 = vmatpush2.msra.mxu0 0.0
    %898 = vmatprep.subr.mxu0 0.0
    %899 = vmatpush2.msra.mxu0 0.0
    %900 = vmatprep.mubr.f32.mxu0 0.0
    %901 = vmatmul.mubr.f32.gmra.mxu0 %v802
    %v902 = vpop.f32.mrf.mxu0
    %v903 = vadd.f32 0.0, %v902
    %v904 = vpop.f32.mrf.mxu0
    %v905 = vadd.f32 0.0, %v904
    %906 = vmatprep.mubr.f32.mxu0 0.0
    %907 = vmatmul.mubr.f32.gmra.mxu0 %v803
    %v908 = vpop.f32.mrf.mxu0
    %v909 = vadd.f32 0.0, %v908
    %v910 = vpop.f32.mrf.mxu0
    %v911 = vadd.f32 0.0, %v910
    %912 = vdwg.mxu0
    %v913 = vld [vmem:[#allocation20] sm:$0xff]
    %v914 = vld [vmem:[#allocation20 + $0x8] sm:$0xff]
    %v915 = vld [vmem:[#allocation20 + $0x10] sm:$0xff]
    %v916 = vld [vmem:[#allocation20 + $0x18] sm:$0xff]
    %v918 = vsel %vm342, %v602, 0
    %v921 = vsel %vm342, %v607, 0
    %923 = vmatprep.subr.mxu0 0.0
    %924 = vmatpush1.msra.mxu0 0.0
    %925 = vmatprep.subr.mxu0 0.0
    %926 = vmatpush1.msra.mxu0 0.0
    %927 = vmatprep.subr.mxu0 0.0
    %928 = vmatpush1.msra.mxu0 0.0
    %929 = vmatprep.subr.mxu0 0.0
    %930 = vmatpush1.msra.mxu0 0.0
    %931 = vmatprep.subr.mxu0 0.0
    %932 = vmatpush1.msra.mxu0 0.0
    %933 = vmatprep.subr.mxu0 0.0
    %934 = vmatpush1.msra.mxu0 0.0
    %935 = vmatprep.subr.mxu0 0.0
    %936 = vmatpush1.msra.mxu0 0.0
    %937 = vmatprep.subr.mxu0 0.0
    %938 = vmatpush1.msra.mxu0 0.0
    %939 = vmatprep.subr.mxu0 0.0
    %940 = vmatpush1.msra.mxu0 0.0
    %941 = vmatprep.subr.mxu0 0.0
    %942 = vmatpush1.msra.mxu0 0.0
    %943 = vmatprep.subr.mxu0 0.0
    %944 = vmatpush1.msra.mxu0 0.0
    %945 = vmatprep.subr.mxu0 0.0
    %946 = vmatpush1.msra.mxu0 0.0
    %947 = vmatprep.subr.mxu0 0.0
    %948 = vmatpush1.msra.mxu0 %v916
    %949 = vmatprep.subr.mxu0 0.0
    %950 = vmatpush1.msra.mxu0 %v915
    %951 = vmatprep.subr.mxu0 0.0
    %952 = vmatpush1.msra.mxu0 %v914
    %953 = vmatprep.subr.mxu0 0.0
    %954 = vmatpush1.msra.mxu0 %v913
    %955 = vmatprep.subr.mxu0 0.0
    %956 = vmatpush2.msra.mxu0 0.0
    %957 = vmatprep.subr.mxu0 0.0
    %958 = vmatpush2.msra.mxu0 0.0
    %959 = vmatprep.subr.mxu0 0.0
    %960 = vmatpush2.msra.mxu0 0.0
    %961 = vmatprep.subr.mxu0 0.0
    %962 = vmatpush2.msra.mxu0 0.0
    %963 = vmatprep.subr.mxu0 0.0
    %964 = vmatpush2.msra.mxu0 0.0
    %965 = vmatprep.subr.mxu0 0.0
    %966 = vmatpush2.msra.mxu0 0.0
    %967 = vmatprep.subr.mxu0 0.0
    %968 = vmatpush2.msra.mxu0 0.0
    %969 = vmatprep.subr.mxu0 0.0
    %970 = vmatpush2.msra.mxu0 0.0
    %971 = vmatprep.subr.mxu0 0.0
    %972 = vmatpush2.msra.mxu0 0.0
    %973 = vmatprep.subr.mxu0 0.0
    %974 = vmatpush2.msra.mxu0 0.0
    %975 = vmatprep.subr.mxu0 0.0
    %976 = vmatpush2.msra.mxu0 0.0
    %977 = vmatprep.subr.mxu0 0.0
    %978 = vmatpush2.msra.mxu0 0.0
    %979 = vmatprep.subr.mxu0 0.0
    %980 = vmatpush2.msra.mxu0 0.0
    %981 = vmatprep.subr.mxu0 0.0
    %982 = vmatpush2.msra.mxu0 0.0
    %983 = vmatprep.subr.mxu0 0.0
    %984 = vmatpush2.msra.mxu0 0.0
    %985 = vmatprep.subr.mxu0 0.0
    %986 = vmatpush2.msra.mxu0 0.0
    %987 = vmatprep.mubr.f32.mxu0 0.0
    %988 = vmatmul.mubr.f32.gmra.mxu0 %v918
    %v989 = vpop.f32.mrf.mxu0
    %v990 = vadd.f32 0.0, %v989
    %v991 = vpop.f32.mrf.mxu0
    %992 = vmatprep.mubr.f32.mxu0 0.0
    %993 = vmatmul.mubr.f32.gmra.mxu0 %v921
    %v994 = vpop.f32.mrf.mxu0
    %v995 = vadd.f32 0.0, %v994
    %v996 = vpop.f32.mrf.mxu0
    %997 = vdwg.mxu0
    %v998 = vmul.f32 %v903, %v990
    %v999 = vmul.f32 %v909, %v995
    %v1000 = vld [vmem:[%s16] sm:$0xff]
    %v1001 = vld [vmem:[%s16 + $0x8] sm:$0xff]
    %v1002 = vld [vmem:[%s16 + $0x10] sm:$0xff]
    %v1003 = vld [vmem:[%s16 + $0x18] sm:$0xff]
    %v1004 = vld [vmem:[%s16 + $0x20] sm:$0xff]
    %v1005 = vld [vmem:[%s16 + $0x28] sm:$0xff]
    %v1006 = vld [vmem:[%s16 + $0x30] sm:$0xff]
    %v1007 = vld [vmem:[%s16 + $0x38] sm:$0xff]
    %v1008 = vld [vmem:[%s16 + $0x40] sm:$0xff]
    %v1009 = vld [vmem:[%s16 + $0x48] sm:$0xff]
    %v1010 = vld [vmem:[%s16 + $0x50] sm:$0xff]
    %v1011 = vld [vmem:[%s16 + $0x58] sm:$0xff]
    %v1012 = vld [vmem:[%s16 + $0x60] sm:$0xff]
    %v1013 = vld [vmem:[%s16 + $0x68] sm:$0xff]
    %v1014 = vld [vmem:[%s16 + $0x70] sm:$0xff]
    %v1015 = vld [vmem:[%s16 + $0x78] sm:$0xff]
    %1016 = vmatprep.subr.mxu0 0.0
    %1017 = vmatpush1.msra.mxu0 %v1015
    %1018 = vmatprep.subr.mxu0 0.0
    %1019 = vmatpush1.msra.mxu0 %v1014
    %1020 = vmatprep.subr.mxu0 0.0
    %1021 = vmatpush1.msra.mxu0 %v1013
    %1022 = vmatprep.subr.mxu0 0.0
    %1023 = vmatpush1.msra.mxu0 %v1012
    %1024 = vmatprep.subr.mxu0 0.0
    %1025 = vmatpush1.msra.mxu0 %v1011
    %1026 = vmatprep.subr.mxu0 0.0
    %1027 = vmatpush1.msra.mxu0 %v1010
    %1028 = vmatprep.subr.mxu0 0.0
    %1029 = vmatpush1.msra.mxu0 %v1009
    %1030 = vmatprep.subr.mxu0 0.0
    %1031 = vmatpush1.msra.mxu0 %v1008
    %1032 = vmatprep.subr.mxu0 0.0
    %1033 = vmatpush1.msra.mxu0 %v1007
    %1034 = vmatprep.subr.mxu0 0.0
    %1035 = vmatpush1.msra.mxu0 %v1006
    %1036 = vmatprep.subr.mxu0 0.0
    %1037 = vmatpush1.msra.mxu0 %v1005
    %1038 = vmatprep.subr.mxu0 0.0
    %1039 = vmatpush1.msra.mxu0 %v1004
    %1040 = vmatprep.subr.mxu0 0.0
    %1041 = vmatpush1.msra.mxu0 %v1003
    %1042 = vmatprep.subr.mxu0 0.0
    %1043 = vmatpush1.msra.mxu0 %v1002
    %1044 = vmatprep.subr.mxu0 0.0
    %1045 = vmatpush1.msra.mxu0 %v1001
    %1046 = vmatprep.subr.mxu0 0.0
    %1047 = vmatpush1.msra.mxu0 %v1000
    %1048 = vmatprep.subr.mxu0 0.0
    %1049 = vmatpush2.msra.mxu0 0.0
    %1050 = vmatprep.subr.mxu0 0.0
    %1051 = vmatpush2.msra.mxu0 0.0
    %1052 = vmatprep.subr.mxu0 0.0
    %1053 = vmatpush2.msra.mxu0 0.0
    %1054 = vmatprep.subr.mxu0 0.0
    %1055 = vmatpush2.msra.mxu0 0.0
    %1056 = vmatprep.subr.mxu0 0.0
    %1057 = vmatpush2.msra.mxu0 0.0
    %1058 = vmatprep.subr.mxu0 0.0
    %1059 = vmatpush2.msra.mxu0 0.0
    %1060 = vmatprep.subr.mxu0 0.0
    %1061 = vmatpush2.msra.mxu0 0.0
    %1062 = vmatprep.subr.mxu0 0.0
    %1063 = vmatpush2.msra.mxu0 0.0
    %1064 = vmatprep.subr.mxu0 0.0
    %1065 = vmatpush2.msra.mxu0 0.0
    %1066 = vmatprep.subr.mxu0 0.0
    %1067 = vmatpush2.msra.mxu0 0.0
    %1068 = vmatprep.subr.mxu0 0.0
    %1069 = vmatpush2.msra.mxu0 0.0
    %1070 = vmatprep.subr.mxu0 0.0
    %1071 = vmatpush2.msra.mxu0 0.0
    %1072 = vmatprep.subr.mxu0 0.0
    %1073 = vmatpush2.msra.mxu0 0.0
    %1074 = vmatprep.subr.mxu0 0.0
    %1075 = vmatpush2.msra.mxu0 0.0
    %1076 = vmatprep.subr.mxu0 0.0
    %1077 = vmatpush2.msra.mxu0 0.0
    %1078 = vmatprep.subr.mxu0 0.0
    %1079 = vmatpush2.msra.mxu0 0.0
    %1080 = vmatprep.mubr.f32.mxu0 0.0
    %1081 = vmatmul.mubr.f32.gmra.mxu0 %v998
    %v1082 = vpop.f32.mrf.mxu0
    %v1083 = vadd.f32 0.0, %v1082
    %v1084 = vpop.f32.mrf.mxu0
    %1085 = vmatprep.mubr.f32.mxu0 0.0
    %1086 = vmatmul.mubr.f32.gmra.mxu0 %v999
    %v1087 = vpop.f32.mrf.mxu0
    %v1088 = vadd.f32 0.0, %v1087
    %v1089 = vpop.f32.mrf.mxu0
    %1090 = vdwg.mxu0
    %v1091 = vmul.f32 %v905, %v905
    %v1092 = vmul.f32 %v911, %v911
    %1093 = vmatprep.subr.mxu0 0.0
    %1094 = vmatpush1.msra.mxu0 %v1015
    %1095 = vmatprep.subr.mxu0 0.0
    %1096 = vmatpush1.msra.mxu0 %v1014
    %1097 = vmatprep.subr.mxu0 0.0
    %1098 = vmatpush1.msra.mxu0 %v1013
    %1099 = vmatprep.subr.mxu0 0.0
    %1100 = vmatpush1.msra.mxu0 %v1012
    %1101 = vmatprep.subr.mxu0 0.0
    %1102 = vmatpush1.msra.mxu0 %v1011
    %1103 = vmatprep.subr.mxu0 0.0
    %1104 = vmatpush1.msra.mxu0 %v1010
    %1105 = vmatprep.subr.mxu0 0.0
    %1106 = vmatpush1.msra.mxu0 %v1009
    %1107 = vmatprep.subr.mxu0 0.0
    %1108 = vmatpush1.msra.mxu0 %v1008
    %1109 = vmatprep.subr.mxu0 0.0
    %1110 = vmatpush1.msra.mxu0 %v1007
    %1111 = vmatprep.subr.mxu0 0.0
    %1112 = vmatpush1.msra.mxu0 %v1006
    %1113 = vmatprep.subr.mxu0 0.0
    %1114 = vmatpush1.msra.mxu0 %v1005
    %1115 = vmatprep.subr.mxu0 0.0
    %1116 = vmatpush1.msra.mxu0 %v1004
    %1117 = vmatprep.subr.mxu0 0.0
    %1118 = vmatpush1.msra.mxu0 %v1003
    %1119 = vmatprep.subr.mxu0 0.0
    %1120 = vmatpush1.msra.mxu0 %v1002
    %1121 = vmatprep.subr.mxu0 0.0
    %1122 = vmatpush1.msra.mxu0 %v1001
    %1123 = vmatprep.subr.mxu0 0.0
    %1124 = vmatpush1.msra.mxu0 %v1000
    %1125 = vmatprep.subr.mxu0 0.0
    %1126 = vmatpush2.msra.mxu0 0.0
    %1127 = vmatprep.subr.mxu0 0.0
    %1128 = vmatpush2.msra.mxu0 0.0
    %1129 = vmatprep.subr.mxu0 0.0
    %1130 = vmatpush2.msra.mxu0 0.0
    %1131 = vmatprep.subr.mxu0 0.0
    %1132 = vmatpush2.msra.mxu0 0.0
    %1133 = vmatprep.subr.mxu0 0.0
    %1134 = vmatpush2.msra.mxu0 0.0
    %1135 = vmatprep.subr.mxu0 0.0
    %1136 = vmatpush2.msra.mxu0 0.0
    %1137 = vmatprep.subr.mxu0 0.0
    %1138 = vmatpush2.msra.mxu0 0.0
    %1139 = vmatprep.subr.mxu0 0.0
    %1140 = vmatpush2.msra.mxu0 0.0
    %1141 = vmatprep.subr.mxu0 0.0
    %1142 = vmatpush2.msra.mxu0 0.0
    %1143 = vmatprep.subr.mxu0 0.0
    %1144 = vmatpush2.msra.mxu0 0.0
    %1145 = vmatprep.subr.mxu0 0.0
    %1146 = vmatpush2.msra.mxu0 0.0
    %1147 = vmatprep.subr.mxu0 0.0
    %1148 = vmatpush2.msra.mxu0 0.0
    %1149 = vmatprep.subr.mxu0 0.0
    %1150 = vmatpush2.msra.mxu0 0.0
    %1151 = vmatprep.subr.mxu0 0.0
    %1152 = vmatpush2.msra.mxu0 0.0
    %1153 = vmatprep.subr.mxu0 0.0
    %1154 = vmatpush2.msra.mxu0 0.0
    %1155 = vmatprep.subr.mxu0 0.0
    %1156 = vmatpush2.msra.mxu0 0.0
    %1157 = vmatprep.mubr.f32.mxu0 0.0
    %1158 = vmatmul.mubr.f32.gmra.mxu0 %v1091
    %v1159 = vpop.f32.mrf.mxu0
    %v1160 = vadd.f32 0.0, %v1159
    %v1161 = vpop.f32.mrf.mxu0
    %1162 = vmatprep.mubr.f32.mxu0 0.0
    %1163 = vmatmul.mubr.f32.gmra.mxu0 %v1092
    %v1164 = vpop.f32.mrf.mxu0
    %v1165 = vadd.f32 0.0, %v1164
    %v1166 = vpop.f32.mrf.mxu0
    %1167 = vdwg.mxu0
    %v1168 = vmax.f32 %v1160, 1e-24
    %v1169 = vmax.f32 %v1165, 1e-24
    %v1170 = vrsqrt.pop %v1168
    %v1171 = vrsqrt.pop %v1169
    %v1172 = vld [vmem:[#allocation22] sm:$0xf]
    %vm1173 = vcmask 31744
    %v1175 = vsel %vm1173, %v1170, 0
    %v1178 = vsel %vm1173, %v1171, 0
    %v1181 = vsel %vm250, %v1172, 0
    %1183 = vmatprep.subr.mxu0 0.0
    %1184 = vmatpush1.msra.mxu0 0.0
    %1185 = vmatprep.subr.mxu0 0.0
    %1186 = vmatpush1.msra.mxu0 0.0
    %1187 = vmatprep.subr.mxu0 0.0
    %1188 = vmatpush1.msra.mxu0 0.0
    %1189 = vmatprep.subr.mxu0 0.0
    %1190 = vmatpush1.msra.mxu0 0.0
    %1191 = vmatprep.subr.mxu0 0.0
    %1192 = vmatpush1.msra.mxu0 0.0
    %1193 = vmatprep.subr.mxu0 0.0
    %1194 = vmatpush1.msra.mxu0 0.0
    %1195 = vmatprep.subr.mxu0 0.0
    %1196 = vmatpush1.msra.mxu0 0.0
    %1197 = vmatprep.subr.mxu0 0.0
    %1198 = vmatpush1.msra.mxu0 0.0
    %1199 = vmatprep.subr.mxu0 0.0
    %1200 = vmatpush1.msra.mxu0 0.0
    %1201 = vmatprep.subr.mxu0 0.0
    %1202 = vmatpush1.msra.mxu0 0.0
    %1203 = vmatprep.subr.mxu0 0.0
    %1204 = vmatpush1.msra.mxu0 0.0
    %1205 = vmatprep.subr.mxu0 0.0
    %1206 = vmatpush1.msra.mxu0 0.0
    %1207 = vmatprep.subr.mxu0 0.0
    %1208 = vmatpush1.msra.mxu0 0.0
    %1209 = vmatprep.subr.mxu0 0.0
    %1210 = vmatpush1.msra.mxu0 0.0
    %1211 = vmatprep.subr.mxu0 0.0
    %1212 = vmatpush1.msra.mxu0 0.0
    %1213 = vmatprep.subr.mxu0 0.0
    %1214 = vmatpush1.msra.mxu0 %v1181
    %1215 = vmatprep.subr.mxu0 0.0
    %1216 = vmatpush2.msra.mxu0 0.0
    %1217 = vmatprep.subr.mxu0 0.0
    %1218 = vmatpush2.msra.mxu0 0.0
    %1219 = vmatprep.subr.mxu0 0.0
    %1220 = vmatpush2.msra.mxu0 0.0
    %1221 = vmatprep.subr.mxu0 0.0
    %1222 = vmatpush2.msra.mxu0 0.0
    %1223 = vmatprep.subr.mxu0 0.0
    %1224 = vmatpush2.msra.mxu0 0.0
    %1225 = vmatprep.subr.mxu0 0.0
    %1226 = vmatpush2.msra.mxu0 0.0
    %1227 = vmatprep.subr.mxu0 0.0
    %1228 = vmatpush2.msra.mxu0 0.0
    %1229 = vmatprep.subr.mxu0 0.0
    %1230 = vmatpush2.msra.mxu0 0.0
    %1231 = vmatprep.subr.mxu0 0.0
    %1232 = vmatpush2.msra.mxu0 0.0
    %1233 = vmatprep.subr.mxu0 0.0
    %1234 = vmatpush2.msra.mxu0 0.0
    %1235 = vmatprep.subr.mxu0 0.0
    %1236 = vmatpush2.msra.mxu0 0.0
    %1237 = vmatprep.subr.mxu0 0.0
    %1238 = vmatpush2.msra.mxu0 0.0
    %1239 = vmatprep.subr.mxu0 0.0
    %1240 = vmatpush2.msra.mxu0 0.0
    %1241 = vmatprep.subr.mxu0 0.0
    %1242 = vmatpush2.msra.mxu0 0.0
    %1243 = vmatprep.subr.mxu0 0.0
    %1244 = vmatpush2.msra.mxu0 0.0
    %1245 = vmatprep.subr.mxu0 0.0
    %1246 = vmatpush2.msra.mxu0 0.0
    %1247 = vmatprep.mubr.f32.mxu0 0.0
    %1248 = vmatmul.mubr.f32.gmra.mxu0 %v1175
    %v1249 = vpop.f32.mrf.mxu0
    %v1250 = vadd.f32 0.0, %v1249
    %v1251 = vpop.f32.mrf.mxu0
    %1252 = vmatprep.mubr.f32.mxu0 0.0
    %1253 = vmatmul.mubr.f32.gmra.mxu0 %v1178
    %v1254 = vpop.f32.mrf.mxu0
    %v1255 = vadd.f32 0.0, %v1254
    %v1256 = vpop.f32.mrf.mxu0
    %1257 = vdwg.mxu0
    %v1258 = vmul.f32 %v905, %v1250
    %v1259 = vmul.f32 %v911, %v1255
    %v1260 = vld [vmem:[%s14] sm:$0xff]
    %v1261 = vld [vmem:[%s14 + $0x8] sm:$0xff]
    %v1262 = vld [vmem:[%s14 + $0x10] sm:$0xff]
    %v1263 = vld [vmem:[%s14 + $0x18] sm:$0xff]
    %v1264 = vld [vmem:[%s14 + $0x20] sm:$0xff]
    %v1265 = vld [vmem:[%s14 + $0x28] sm:$0xff]
    %v1266 = vld [vmem:[%s14 + $0x30] sm:$0xff]
    %v1267 = vld [vmem:[%s14 + $0x38] sm:$0xff]
    %v1268 = vld [vmem:[%s14 + $0x40] sm:$0xff]
    %v1269 = vld [vmem:[%s14 + $0x48] sm:$0xff]
    %v1270 = vld [vmem:[%s14 + $0x50] sm:$0xff]
    %v1271 = vld [vmem:[%s14 + $0x58] sm:$0xff]
    %v1272 = vld [vmem:[%s14 + $0x60] sm:$0xff]
    %v1273 = vld [vmem:[%s14 + $0x68] sm:$0xff]
    %v1274 = vld [vmem:[%s14 + $0x70] sm:$0xff]
    %v1275 = vld [vmem:[%s14 + $0x78] sm:$0xff]
    %1276 = vmatprep.subr.mxu0 0.0
    %1277 = vmatpush1.msra.mxu0 %v1275
    %1278 = vmatprep.subr.mxu0 0.0
    %1279 = vmatpush1.msra.mxu0 %v1274
    %1280 = vmatprep.subr.mxu0 0.0
    %1281 = vmatpush1.msra.mxu0 %v1273
    %1282 = vmatprep.subr.mxu0 0.0
    %1283 = vmatpush1.msra.mxu0 %v1272
    %1284 = vmatprep.subr.mxu0 0.0
    %1285 = vmatpush1.msra.mxu0 %v1271
    %1286 = vmatprep.subr.mxu0 0.0
    %1287 = vmatpush1.msra.mxu0 %v1270
    %1288 = vmatprep.subr.mxu0 0.0
    %1289 = vmatpush1.msra.mxu0 %v1269
    %1290 = vmatprep.subr.mxu0 0.0
    %1291 = vmatpush1.msra.mxu0 %v1268
    %1292 = vmatprep.subr.mxu0 0.0
    %1293 = vmatpush1.msra.mxu0 %v1267
    %1294 = vmatprep.subr.mxu0 0.0
    %1295 = vmatpush1.msra.mxu0 %v1266
    %1296 = vmatprep.subr.mxu0 0.0
    %1297 = vmatpush1.msra.mxu0 %v1265
    %1298 = vmatprep.subr.mxu0 0.0
    %1299 = vmatpush1.msra.mxu0 %v1264
    %1300 = vmatprep.subr.mxu0 0.0
    %1301 = vmatpush1.msra.mxu0 %v1263
    %1302 = vmatprep.subr.mxu0 0.0
    %1303 = vmatpush1.msra.mxu0 %v1262
    %1304 = vmatprep.subr.mxu0 0.0
    %1305 = vmatpush1.msra.mxu0 %v1261
    %1306 = vmatprep.subr.mxu0 0.0
    %1307 = vmatpush1.msra.mxu0 %v1260
    %1308 = vmatprep.subr.mxu0 0.0
    %1309 = vmatpush2.msra.mxu0 0.0
    %1310 = vmatprep.subr.mxu0 0.0
    %1311 = vmatpush2.msra.mxu0 0.0
    %1312 = vmatprep.subr.mxu0 0.0
    %1313 = vmatpush2.msra.mxu0 0.0
    %1314 = vmatprep.subr.mxu0 0.0
    %1315 = vmatpush2.msra.mxu0 0.0
    %1316 = vmatprep.subr.mxu0 0.0
    %1317 = vmatpush2.msra.mxu0 0.0
    %1318 = vmatprep.subr.mxu0 0.0
    %1319 = vmatpush2.msra.mxu0 0.0
    %1320 = vmatprep.subr.mxu0 0.0
    %1321 = vmatpush2.msra.mxu0 0.0
    %1322 = vmatprep.subr.mxu0 0.0
    %1323 = vmatpush2.msra.mxu0 0.0
    %1324 = vmatprep.subr.mxu0 0.0
    %1325 = vmatpush2.msra.mxu0 0.0
    %1326 = vmatprep.subr.mxu0 0.0
    %1327 = vmatpush2.msra.mxu0 0.0
    %1328 = vmatprep.subr.mxu0 0.0
    %1329 = vmatpush2.msra.mxu0 0.0
    %1330 = vmatprep.subr.mxu0 0.0
    %1331 = vmatpush2.msra.mxu0 0.0
    %1332 = vmatprep.subr.mxu0 0.0
    %1333 = vmatpush2.msra.mxu0 0.0
    %1334 = vmatprep.subr.mxu0 0.0
    %1335 = vmatpush2.msra.mxu0 0.0
    %1336 = vmatprep.subr.mxu0 0.0
    %1337 = vmatpush2.msra.mxu0 0.0
    %1338 = vmatprep.subr.mxu0 0.0
    %1339 = vmatpush2.msra.mxu0 0.0
    %1340 = vmatprep.mubr.f32.mxu0 0.0
    %1341 = vmatmul.mubr.f32.gmra.mxu0 %v1258
    %v1342 = vpop.f32.mrf.mxu0
    %v1343 = vadd.f32 0.0, %v1342
    %v1344 = vpop.f32.mrf.mxu0
    %1345 = vmatprep.mubr.f32.mxu0 0.0
    %1346 = vmatmul.mubr.f32.gmra.mxu0 %v1259
    %v1347 = vpop.f32.mrf.mxu0
    %v1348 = vadd.f32 0.0, %v1347
    %v1349 = vpop.f32.mrf.mxu0
    %1350 = vdwg.mxu0
    %v1351 = vmul.f32 %v1343, %v1343
    %v1352 = vmul.f32 %v1348, %v1348
    %v1353 = vsel %vm342, %v1351, 0.0
    %1354 = vadd.xlane.f32.xlu0 %v1353
    %v1355 = vpop.xlane.xlu0 %1354
    %v1356 = vsel %vm342, %v1352, 0.0
    %1357 = vadd.xlane.f32.xlu0 %v1356
    %v1358 = vpop.xlane.xlu0 %1357
    %v1359 = vsel %vm1173, %v1083, -inf
    %1360 = vmax.xlane.f32.xlu0 %v1359
    %v1361 = vpop.xlane.xlu0 %1360
    %v1362 = vsel %vm1173, %v1088, -inf
    %1363 = vmax.xlane.f32.xlu0 %v1362
    %v1364 = vpop.xlane.xlu0 %1363
    %v1365 = vsub.f32 %v1083, %v1361
    %v1366 = vsub.f32 %v1088, %v1364
    %v1367 = vmul.f32 %v1365, 1.442695
    %v1368 = vpow.pop %v1367
    %v1369 = vmul.f32 %v1366, 1.442695
    %v1370 = vpow.pop %v1369
    %v1371 = vsel %vm1173, %v1368, 0.0
    %1372 = vadd.xlane.f32.xlu0 %v1371
    %v1373 = vpop.xlane.xlu0 %1372
    %v1374 = vsel %vm1173, %v1370, 0.0
    %1375 = vadd.xlane.f32.xlu0 %v1374
    %v1376 = vpop.xlane.xlu0 %1375
    %v1377 = vrcp.pop %v1373
    %v1378 = vrcp.pop %v1376
    %v1379 = vmul.f32 %v1368, %v1377
    %v1380 = vmul.f32 %v1370, %v1378
    %v1381 = vadd.f32 %v1379, 1e-06
    %v1382 = vadd.f32 %v1380, 1e-06
    %v1383 = vlog2.pop %v1381
    %v1384 = vmul.f32 %v1383, 0.6931472
    %v1385 = vlog2.pop %v1382
    %v1386 = vmul.f32 %v1385, 0.6931472
    %v1387 = vsel %vm1173, %v1384, 0.0
    %1388 = vadd.xlane.f32.xlu0 %v1387
    %v1389 = vpop.xlane.xlu0 %1388
    %v1390 = vsel %vm1173, %v1386, 0.0
    %1391 = vadd.xlane.f32.xlu0 %v1390
    %v1392 = vpop.xlane.xlu0 %1391
    %v1393 = vmul.f32 %v1389, -0.0025
    %v1394 = vmul.f32 %v1392, -0.0025
    %v1396 = vsel %vm1173, %v1379, 0
    %v1399 = vsel %vm1173, %v1380, 0
    %1401 = vmatprep.subr.mxu0 0.0
    %1402 = vmatpush1.msra.mxu0 0.0
    %1403 = vmatprep.subr.mxu0 0.0
    %1404 = vmatpush1.msra.mxu0 0.0
    %1405 = vmatprep.subr.mxu0 0.0
    %1406 = vmatpush1.msra.mxu0 0.0
    %1407 = vmatprep.subr.mxu0 0.0
    %1408 = vmatpush1.msra.mxu0 0.0
    %1409 = vmatprep.subr.mxu0 0.0
    %1410 = vmatpush1.msra.mxu0 0.0
    %1411 = vmatprep.subr.mxu0 0.0
    %1412 = vmatpush1.msra.mxu0 0.0
    %1413 = vmatprep.subr.mxu0 0.0
    %1414 = vmatpush1.msra.mxu0 0.0
    %1415 = vmatprep.subr.mxu0 0.0
    %1416 = vmatpush1.msra.mxu0 0.0
    %1417 = vmatprep.subr.mxu0 0.0
    %1418 = vmatpush1.msra.mxu0 0.0
    %1419 = vmatprep.subr.mxu0 0.0
    %1420 = vmatpush1.msra.mxu0 0.0
    %1421 = vmatprep.subr.mxu0 0.0
    %1422 = vmatpush1.msra.mxu0 0.0
    %1423 = vmatprep.subr.mxu0 0.0
    %1424 = vmatpush1.msra.mxu0 0.0
    %1425 = vmatprep.subr.mxu0 0.0
    %1426 = vmatpush1.msra.mxu0 0.0
    %1427 = vmatprep.subr.mxu0 0.0
    %1428 = vmatpush1.msra.mxu0 0.0
    %1429 = vmatprep.subr.mxu0 0.0
    %1430 = vmatpush1.msra.mxu0 0.0
    %1431 = vmatprep.subr.mxu0 0.0
    %1432 = vmatpush1.msra.mxu0 %v1181
    %1433 = vmatprep.subr.mxu0 0.0
    %1434 = vmatpush2.msra.mxu0 0.0
    %1435 = vmatprep.subr.mxu0 0.0
    %1436 = vmatpush2.msra.mxu0 0.0
    %1437 = vmatprep.subr.mxu0 0.0
    %1438 = vmatpush2.msra.mxu0 0.0
    %1439 = vmatprep.subr.mxu0 0.0
    %1440 = vmatpush2.msra.mxu0 0.0
    %1441 = vmatprep.subr.mxu0 0.0
    %1442 = vmatpush2.msra.mxu0 0.0
    %1443 = vmatprep.subr.mxu0 0.0
    %1444 = vmatpush2.msra.mxu0 0.0
    %1445 = vmatprep.subr.mxu0 0.0
    %1446 = vmatpush2.msra.mxu0 0.0
    %1447 = vmatprep.subr.mxu0 0.0
    %1448 = vmatpush2.msra.mxu0 0.0
    %1449 = vmatprep.subr.mxu0 0.0
    %1450 = vmatpush2.msra.mxu0 0.0
    %1451 = vmatprep.subr.mxu0 0.0
    %1452 = vmatpush2.msra.mxu0 0.0
    %1453 = vmatprep.subr.mxu0 0.0
    %1454 = vmatpush2.msra.mxu0 0.0
    %1455 = vmatprep.subr.mxu0 0.0
    %1456 = vmatpush2.msra.mxu0 0.0
    %1457 = vmatprep.subr.mxu0 0.0
    %1458 = vmatpush2.msra.mxu0 0.0
    %1459 = vmatprep.subr.mxu0 0.0
    %1460 = vmatpush2.msra.mxu0 0.0
    %1461 = vmatprep.subr.mxu0 0.0
    %1462 = vmatpush2.msra.mxu0 0.0
    %1463 = vmatprep.subr.mxu0 0.0
    %1464 = vmatpush2.msra.mxu0 0.0
    %1465 = vmatprep.mubr.f32.mxu0 0.0
    %1466 = vmatmul.mubr.f32.gmra.mxu0 %v1396
    %v1467 = vpop.f32.mrf.mxu0
    %v1468 = vadd.f32 0.0, %v1467
    %v1469 = vpop.f32.mrf.mxu0
    %1470 = vmatprep.mubr.f32.mxu0 0.0
    %1471 = vmatmul.mubr.f32.gmra.mxu0 %v1399
    %v1472 = vpop.f32.mrf.mxu0
    %v1473 = vadd.f32 0.0, %v1472
    %v1474 = vpop.f32.mrf.mxu0
    %1475 = vdwg.mxu0
    %v1476 = vmul.f32 %v1468, %v905
    %v1477 = vmul.f32 %v1473, %v911
    %1478 = vmatprep.subr.mxu0 0.0
    %1479 = vmatpush1.msra.mxu0 %v1275
    %1480 = vmatprep.subr.mxu0 0.0
    %1481 = vmatpush1.msra.mxu0 %v1274
    %1482 = vmatprep.subr.mxu0 0.0
    %1483 = vmatpush1.msra.mxu0 %v1273
    %1484 = vmatprep.subr.mxu0 0.0
    %1485 = vmatpush1.msra.mxu0 %v1272
    %1486 = vmatprep.subr.mxu0 0.0
    %1487 = vmatpush1.msra.mxu0 %v1271
    %1488 = vmatprep.subr.mxu0 0.0
    %1489 = vmatpush1.msra.mxu0 %v1270
    %1490 = vmatprep.subr.mxu0 0.0
    %1491 = vmatpush1.msra.mxu0 %v1269
    %1492 = vmatprep.subr.mxu0 0.0
    %1493 = vmatpush1.msra.mxu0 %v1268
    %1494 = vmatprep.subr.mxu0 0.0
    %1495 = vmatpush1.msra.mxu0 %v1267
    %1496 = vmatprep.subr.mxu0 0.0
    %1497 = vmatpush1.msra.mxu0 %v1266
    %1498 = vmatprep.subr.mxu0 0.0
    %1499 = vmatpush1.msra.mxu0 %v1265
    %1500 = vmatprep.subr.mxu0 0.0
    %1501 = vmatpush1.msra.mxu0 %v1264
    %1502 = vmatprep.subr.mxu0 0.0
    %1503 = vmatpush1.msra.mxu0 %v1263
    %1504 = vmatprep.subr.mxu0 0.0
    %1505 = vmatpush1.msra.mxu0 %v1262
    %1506 = vmatprep.subr.mxu0 0.0
    %1507 = vmatpush1.msra.mxu0 %v1261
    %1508 = vmatprep.subr.mxu0 0.0
    %1509 = vmatpush1.msra.mxu0 %v1260
    %1510 = vmatprep.subr.mxu0 0.0
    %1511 = vmatpush2.msra.mxu0 0.0
    %1512 = vmatprep.subr.mxu0 0.0
    %1513 = vmatpush2.msra.mxu0 0.0
    %1514 = vmatprep.subr.mxu0 0.0
    %1515 = vmatpush2.msra.mxu0 0.0
    %1516 = vmatprep.subr.mxu0 0.0
    %1517 = vmatpush2.msra.mxu0 0.0
    %1518 = vmatprep.subr.mxu0 0.0
    %1519 = vmatpush2.msra.mxu0 0.0
    %1520 = vmatprep.subr.mxu0 0.0
    %1521 = vmatpush2.msra.mxu0 0.0
    %1522 = vmatprep.subr.mxu0 0.0
    %1523 = vmatpush2.msra.mxu0 0.0
    %1524 = vmatprep.subr.mxu0 0.0
    %1525 = vmatpush2.msra.mxu0 0.0
    %1526 = vmatprep.subr.mxu0 0.0
    %1527 = vmatpush2.msra.mxu0 0.0
    %1528 = vmatprep.subr.mxu0 0.0
    %1529 = vmatpush2.msra.mxu0 0.0
    %1530 = vmatprep.subr.mxu0 0.0
    %1531 = vmatpush2.msra.mxu0 0.0
    %1532 = vmatprep.subr.mxu0 0.0
    %1533 = vmatpush2.msra.mxu0 0.0
    %1534 = vmatprep.subr.mxu0 0.0
    %1535 = vmatpush2.msra.mxu0 0.0
    %1536 = vmatprep.subr.mxu0 0.0
    %1537 = vmatpush2.msra.mxu0 0.0
    %1538 = vmatprep.subr.mxu0 0.0
    %1539 = vmatpush2.msra.mxu0 0.0
    %1540 = vmatprep.subr.mxu0 0.0
    %1541 = vmatpush2.msra.mxu0 0.0
    %1542 = vmatprep.mubr.f32.mxu0 0.0
    %1543 = vmatmul.mubr.f32.gmra.mxu0 %v1476
    %v1544 = vpop.f32.mrf.mxu0
    %v1545 = vadd.f32 0.0, %v1544
    %v1546 = vpop.f32.mrf.mxu0
    %1547 = vmatprep.mubr.f32.mxu0 0.0
    %1548 = vmatmul.mubr.f32.gmra.mxu0 %v1477
    %v1549 = vpop.f32.mrf.mxu0
    %v1550 = vadd.f32 0.0, %v1549
    %v1551 = vpop.f32.mrf.mxu0
    %1552 = vdwg.mxu0
    %v1553 = vld [vmem:[%s18] sm:$0xff]
    %v1554 = vld [vmem:[%s18 + $0x8] sm:$0xff]
    %v1555 = vld [vmem:[%s18 + $0x10] sm:$0xff]
    %v1556 = vld [vmem:[%s18 + $0x18] sm:$0xff]
    %v1557 = vld [vmem:[%s19] sm:$0x1]
    %v1559 = vlaneseq
    %v1560 = vshrl.u32 %v1559, 7
    %v1561 = vsub.s32 0, %v1560
    %v1562 = vrot.slane %v1557, %v1561
    %v1565 = vsel %vm342, %v1545, 0
    %v1568 = vsel %vm342, %v1550, 0
    %1570 = vmatprep.subr.mxu0 0.0
    %1571 = vmatpush1.msra.mxu0 0.0
    %1572 = vmatprep.subr.mxu0 0.0
    %1573 = vmatpush1.msra.mxu0 0.0
    %1574 = vmatprep.subr.mxu0 0.0
    %1575 = vmatpush1.msra.mxu0 0.0
    %1576 = vmatprep.subr.mxu0 0.0
    %1577 = vmatpush1.msra.mxu0 0.0
    %1578 = vmatprep.subr.mxu0 0.0
    %1579 = vmatpush1.msra.mxu0 0.0
    %1580 = vmatprep.subr.mxu0 0.0
    %1581 = vmatpush1.msra.mxu0 0.0
    %1582 = vmatprep.subr.mxu0 0.0
    %1583 = vmatpush1.msra.mxu0 0.0
    %1584 = vmatprep.subr.mxu0 0.0
    %1585 = vmatpush1.msra.mxu0 0.0
    %1586 = vmatprep.subr.mxu0 0.0
    %1587 = vmatpush1.msra.mxu0 0.0
    %1588 = vmatprep.subr.mxu0 0.0
    %1589 = vmatpush1.msra.mxu0 0.0
    %1590 = vmatprep.subr.mxu0 0.0
    %1591 = vmatpush1.msra.mxu0 0.0
    %1592 = vmatprep.subr.mxu0 0.0
    %1593 = vmatpush1.msra.mxu0 0.0
    %1594 = vmatprep.subr.mxu0 0.0
    %1595 = vmatpush1.msra.mxu0 %v1556
    %1596 = vmatprep.subr.mxu0 0.0
    %1597 = vmatpush1.msra.mxu0 %v1555
    %1598 = vmatprep.subr.mxu0 0.0
    %1599 = vmatpush1.msra.mxu0 %v1554
    %1600 = vmatprep.subr.mxu0 0.0
    %1601 = vmatpush1.msra.mxu0 %v1553
    %1602 = vmatprep.subr.mxu0 0.0
    %1603 = vmatpush2.msra.mxu0 0.0
    %1604 = vmatprep.subr.mxu0 0.0
    %1605 = vmatpush2.msra.mxu0 0.0
    %1606 = vmatprep.subr.mxu0 0.0
    %1607 = vmatpush2.msra.mxu0 0.0
    %1608 = vmatprep.subr.mxu0 0.0
    %1609 = vmatpush2.msra.mxu0 0.0
    %1610 = vmatprep.subr.mxu0 0.0
    %1611 = vmatpush2.msra.mxu0 0.0
    %1612 = vmatprep.subr.mxu0 0.0
    %1613 = vmatpush2.msra.mxu0 0.0
    %1614 = vmatprep.subr.mxu0 0.0
    %1615 = vmatpush2.msra.mxu0 0.0
    %1616 = vmatprep.subr.mxu0 0.0
    %1617 = vmatpush2.msra.mxu0 0.0
    %1618 = vmatprep.subr.mxu0 0.0
    %1619 = vmatpush2.msra.mxu0 0.0
    %1620 = vmatprep.subr.mxu0 0.0
    %1621 = vmatpush2.msra.mxu0 0.0
    %1622 = vmatprep.subr.mxu0 0.0
    %1623 = vmatpush2.msra.mxu0 0.0
    %1624 = vmatprep.subr.mxu0 0.0
    %1625 = vmatpush2.msra.mxu0 0.0
    %1626 = vmatprep.subr.mxu0 0.0
    %1627 = vmatpush2.msra.mxu0 0.0
    %1628 = vmatprep.subr.mxu0 0.0
    %1629 = vmatpush2.msra.mxu0 0.0
    %1630 = vmatprep.subr.mxu0 0.0
    %1631 = vmatpush2.msra.mxu0 0.0
    %1632 = vmatprep.subr.mxu0 0.0
    %1633 = vmatpush2.msra.mxu0 0.0
    %1634 = vmatprep.mubr.f32.mxu0 0.0
    %1635 = vmatmul.mubr.f32.gmra.mxu0 %v1565
    %v1636 = vpop.f32.mrf.mxu0
    %v1637 = vadd.f32 %v1562, %v1636
    %v1638 = vpop.f32.mrf.mxu0
    %1639 = vmatprep.mubr.f32.mxu0 0.0
    %1640 = vmatmul.mubr.f32.gmra.mxu0 %v1568
    %v1641 = vpop.f32.mrf.mxu0
    %v1642 = vadd.f32 %v1562, %v1641
    %v1643 = vpop.f32.mrf.mxu0
    %1644 = vdwg.mxu0
    %v1645 = vlaneseq
    %v1646 = vand.u32 %v1645, 127
    %vm1647 = vcmp.ge.s32.totalorder %v1646, 4
    %vm1648 = vcmp.lt.s32.totalorder %v1646, 8
    %vm1649 = vmand %vm1647, %vm1648
    %v1650 = vmax.f32 %v1637, -20.0
    %v1651 = vmax.f32 %v1642, -20.0
    %v1652 = vmin.f32 %v1650, 2.0
    %v1653 = vmin.f32 %v1651, 2.0
    %v1654 = vsel %vm1649, %v1652, %v1637
    %v1655 = vsel %vm1649, %v1653, %v1642
    %vm1656 = vcmp.eq.s32.totalorder %v1646, 8
    %v1657 = vsel %vm1656, %v1393, 0.0
    %v1658 = vsel %vm1656, %v1394, 0.0
    %v1659 = vadd.f32 %v1654, %v1657
    %v1660 = vadd.f32 %v1655, %v1658
    %vm1661 = vcmp.eq.s32.totalorder %v1646, 9
    %v1662 = vsel %vm1661, %v1355, 0.0
    %v1663 = vsel %vm1661, %v1358, 0.0
    %v1664 = vadd.f32 %v1659, %v1662
    %v1665 = vadd.f32 %v1660, %v1663
    %1666 = vst [vmem:[#allocation23] sm:$0xff] %v1664
    %1667 = vst [vmem:[#allocation23 + $0x8] sm:$0xff] %v1665
    // Predicated region
    $region134: #{tpu_custom_call.1} parent=1 // pred_check
      _
    $region135: #{tpu_custom_call.1} parent=1 // pred_check_branch
      %1669 = sbr.rel (0) target = $region137
    $region136: #{tpu_custom_call.1} parent=1 // pred_region
      %s1671 = ssub.s32 256, 256
      %1672 = vsyncadd [#allocation4], %s1671
      %s1673 = sshll.u32 [#allocation23], 4
      %s1674 = int_to_ptr.vmem [resolvable:$true] %s1673
      %1679 = dma.vmem_to_hbm [thread:$0]  %s1674, 256, %s20, [#allocation4], 128, 128, 8
    $region137: #{tpu_custom_call.1} parent=1 // pred_fallthru
      _
    // Predicated region
    $region138: #{tpu_custom_call.1} parent=1 // pred_check
      _
    $region139: #{tpu_custom_call.1} parent=1 // pred_check_branch
      %1681 = sbr.rel (0) target = $region141
    $region140: #{tpu_custom_call.1} parent=1 // pred_region
      %1682 = dma.done [#allocation4], 256
    $region141: #{tpu_custom_call.1} parent=1 // pred_fallthru
      _
    %1683 = vsyncpa [#allocation3], 1
    %1684 = vsyncpa [#allocation6], 1
    %1685 = vsyncpa [#allocation9], 1
    %1686 = vsyncpa [#allocation12], 1
    %1687 = vsyncpa [#allocation15], 1
    %1688 = vsyncpa [#allocation18], 1
    %1689 = vsyncpa [#allocation21], 1
    %1690 = vsyncpa [#allocation4], 1

</llo_original>
